<compile_context>
chip_gen: v7x
topology: tpu7x:2x2x1
jax: 0.10.0
libtpu: 0.0.40
codegen_flags: <defaults>
</compile_context>

<pallas_src>
import functools

import jax
import jax.numpy as jnp
from jax.experimental import pallas as pl
from jax.experimental.pallas import tpu as pltpu


def _data_eval_kernel(meta_ref, x_ref, w_ref, b_ref, out_ref, *, n_valid, exp_bf16):
    cc = pl.program_id(0)          # outer (parallel) split
    i = pl.program_id(1)           # inner reduction step
    steps = pl.num_programs(1)

    # out_ref's block index depends only on cc, so it stays resident across the inner
    # axis: accumulate straight into it (no scratch, no flush copy).
    @pl.when(i == 0)
    def _init():
        out_ref[...] = jnp.zeros_like(out_ref)

    tn = x_ref.shape[0]
    cp = w_ref.shape[1]
    gp = out_ref.shape[1]

    # Validity mask for the ragged tail: rows past n_valid (and fully out-of-range
    # duplicate blocks produced by the clamped index_map) contribute nothing.
    row0 = (cc * steps + i) * tn
    rows = jax.lax.broadcasted_iota(jnp.int32, (tn, 1), 0) + row0
    valid = rows < n_valid

    # logits (TN, CP) in f32: x cast to bf16 in-kernel (MXU-native), f32 accumulate.
    # Padded class columns carry a -1e30 bias so they vanish from max / logsumexp.
    logits = jnp.dot(x_ref[...].astype(jnp.bfloat16), w_ref[...],
                     preferred_element_type=jnp.float32) + b_ref[...]

    # per-sample cross entropy = logsumexp(logits) - logits[label]
    mx = jnp.max(logits, axis=-1, keepdims=True)
    shifted = logits - mx
    if exp_bf16:
        # v6e/v7x: bf16 EUP runs ~2x the f32 rate; sum and log stay in f32.
        e = jnp.exp(shifted.astype(jnp.bfloat16)).astype(jnp.float32)
    else:
        e = jnp.exp(shifted)
    # TODO(synk): if profiling confirms EUP saturation at small C, compact valid class
    # lanes (pack 128/C samples per 128-lane row via XLU shuffles) before the exp.
    lse = mx + jnp.log(jnp.sum(e, axis=-1, keepdims=True))

    labels = meta_ref[:, 0:1]      # (TN, 1) int32
    gids = meta_ref[:, 1:2]        # (TN, 1) int32

    ccol = jax.lax.broadcasted_iota(jnp.int32, (tn, cp), 1)
    true_logit = jnp.sum(jnp.where(ccol == labels, logits, 0.0),
                         axis=-1, keepdims=True)
    # Clamp matches the 1/CE semantics but guards the 1/0 degenerate sample (a
    # near-perfectly classified sample still dominates, as in the PyTorch module).
    loss = jnp.maximum(lse - true_logit, 1e-12)
    q = pl.reciprocal(loss, approx=True)            # (TN, 1), EUP slot

    # Scatter q into lane-dense group columns; the last lane collects the global total.
    gcol = jax.lax.broadcasted_iota(jnp.int32, (tn, gp), 1)
    contrib = jnp.where(valid & ((gcol == gids) | (gcol == gp - 1)), q, 0.0)

    # Full-precision column sum on the (idle) XLU — avoids the implicit bf16 truncation
    # of q that a default-precision f32 MXU dot would introduce.
    out_ref[...] += jnp.sum(contrib, axis=0, keepdims=True)


@functools.partial(jax.jit,
                   static_argnames=("num_groups", "block_n", "n_split", "exp_bf16"))
def data_eval_sup_cls(x, labels, group_ids, w, b, *, num_groups,
                      block_n=512, n_split=1, exp_bf16=False):
    n, d = x.shape
    c = w.shape[1]
    lane = 128
    cp = ((c + lane - 1) // lane) * lane       # lane-dense class dim (padded logits -> -1e30)
    gp = lane                                  # lane-dense group dim; last lane = global total
    assert num_groups <= gp - 1

    # Tile size: as large as useful but never (much) larger than the dataset.
    bn = max(8, min(block_n, ((n + 7) // 8) * 8))
    nblk = pl.cdiv(n, bn)                      # valid row-blocks in x
    steps = pl.cdiv(nblk, n_split)             # inner reduction steps per outer split

    # Resident classifier head: bf16 weights, f32 bias with -1e30 in padded class lanes.
    w_p = jnp.zeros((d, cp), jnp.bfloat16).at[:, :c].set(w.astype(jnp.bfloat16))
    b_p = jnp.full((1, cp), -1e30, jnp.float32).at[0, :c].set(b.astype(jnp.float32))

    # Labels + group ids packed into a single int32 stream (one small DMA per step).
    meta = jnp.stack([labels.astype(jnp.int32), group_ids.astype(jnp.int32)], axis=1)

    # Row-block index map: clamp so blocks past the end of the data re-read the last
    # valid block (their rows are masked out in-kernel via `rows < n`).
    def row_map(cc, i):
        return (jnp.minimum(cc * steps + i, nblk - 1), 0)

    kernel = functools.partial(_data_eval_kernel, n_valid=n, exp_bf16=exp_bf16)

    raw = pl.pallas_call(
        kernel,
        out_shape=jax.ShapeDtypeStruct((1, n_split * gp), jnp.float32),
        grid_spec=pltpu.PrefetchScalarGridSpec(
            num_scalar_prefetch=0,
            grid=(n_split, steps),
            in_specs=[
                pl.BlockSpec((bn, 2), row_map),                 # packed labels / group ids
                pl.BlockSpec((bn, d), row_map),                 # x, streamed in f32
                pl.BlockSpec((d, cp), lambda cc, i: (0, 0)),    # W resident (bf16)
                pl.BlockSpec((1, cp), lambda cc, i: (0, 0)),    # b resident (f32)
            ],
            out_specs=pl.BlockSpec((1, gp), lambda cc, i: (0, cc)),
        ),
        compiler_params=pltpu.CompilerParams(
            # TODO(synk): on v7x, pass n_split=2 and use pltpu.CORE_PARALLEL on the outer
            # axis to guarantee the 2-TensorCore split.
            dimension_semantics=("parallel", "arbitrary"),
            vmem_limit_bytes=32 * 1024 * 1024,   # tiles are tiny; safe on v5e/v6e/v7x
        ),
        cost_estimate=pl.CostEstimate(
            flops=2 * n * d * cp + 4 * n * cp + 2 * n * gp,
            transcendentals=n * cp + 2 * n,
            bytes_accessed=(x.size * 4 + meta.size * 4 + w_p.size * 2
                            + b_p.size * 4 + n_split * gp * 4),
        ),
    )(meta, x, w_p, b_p)

    # Combine per-split partial sums exactly in f32; last lane holds sum_i q_i.
    gsum = raw.reshape(n_split, gp).sum(axis=0)
    return gsum[:num_groups] / gsum[gp - 1]


def _bf16_eup_supported():
    # bf16 exp is only a win (and only guaranteed supported) on v6e / v7x EUPs.
    try:
        kind = jax.devices()[0].device_kind.lower()
    except Exception:
        return False
    return ("v6" in kind) or ("v7" in kind) or ("7x" in kind)


def _reference(x, y, w, b, group_id, num_groups):
    logits = x @ w + b
    lse = jax.scipy.special.logsumexp(logits, axis=-1)
    loss = lse - jnp.take_along_axis(logits, y[:, None], axis=-1)[:, 0]
    q = 1.0 / loss
    gsum = (q[:, None] * jax.nn.one_hot(group_id, num_groups, dtype=q.dtype)).sum(axis=0)
    return gsum / q.sum()


if __name__ == "__main__":
    # N not a multiple of block_n so the ragged-tail masking path is exercised.
    N, D, C, G = 1000, 32, 8, 4          # samples, features, classes, data partitions

    key = jax.random.PRNGKey(0)
    kx, ky, kw, kb = jax.random.split(key, 4)

    # "data_loader" contents (all batches concatenated), deterministic.
    x = jax.random.normal(kx, (N, D), dtype=jnp.float32)
    y = jax.random.randint(ky, (N,), 0, C).astype(jnp.int32)

    # Deterministic linear classifier stands in for self.model.
    w = 0.1 * jax.random.normal(kw, (D, C), dtype=jnp.float32)
    b = 0.01 * jax.random.normal(kb, (C,), dtype=jnp.float32)

    # get_local_didx_list(datanums): split dataset indices into G contiguous groups.
    group_id = jnp.minimum(jnp.arange(N) // (N // G), G - 1).astype(jnp.int32)

    weights = data_eval_sup_cls(x, y, group_id, w, b, num_groups=G,
                                exp_bf16=_bf16_eup_supported())
    weights = jax.block_until_ready(weights)

    ref = _reference(x, y, w, b, group_id, G)
    assert weights.shape == (G,)
    # bf16 matmul (+ optional bf16 exp on v6e/v7x) + approx reciprocal => relaxed tolerance.
    assert jnp.allclose(weights, ref, rtol=3e-2, atol=3e-3), (weights, ref)

    print("KERNEL_OK")
</pallas_src>

<mosaic_0001>
module attributes {stable_mosaic.version = 11 : i64} {
  func.func @_data_eval_kernel(%arg0: i32, %arg1: i32, %arg2: memref<512x2xi32, #tpu.memory_space<vmem>>, %arg3: memref<512x32xf32, #tpu.memory_space<vmem>>, %arg4: memref<32x128xbf16, #tpu.memory_space<vmem>>, %arg5: memref<1x128xf32, #tpu.memory_space<vmem>>, %arg6: memref<1x128xf32, #tpu.memory_space<vmem>>) attributes {dimension_semantics = [#tpu.dimension_semantics<parallel>, #tpu.dimension_semantics<arbitrary>], iteration_bounds = array<i64: 1, 2>, scalar_prefetch = 0 : i64, scratch_operands = 0 : i64, tpu.core_type = #tpu.core_type<tc>, window_params = [{transform_indices = @transform_0, window_bounds = array<i64: 512, 2>}, {transform_indices = @transform_1, window_bounds = array<i64: 512, 32>}, {pipeline_mode = #tpu.pipeline_mode<synchronous>, transform_indices = @transform_2, window_bounds = array<i64: 32, 128>}, {pipeline_mode = #tpu.pipeline_mode<synchronous>, transform_indices = @transform_3, window_bounds = array<i64: 1, 128>}, {transform_indices = @transform_4, window_bounds = array<i64: 1, 128>}]} {
    %c0_i32 = arith.constant 0 : i32
    %0 = arith.cmpi eq, %arg1, %c0_i32 : i32
    %1 = arith.extui %0 : i1 to i32
    %c0_i32_0 = arith.constant 0 : i32
    %2 = arith.cmpi ne, %1, %c0_i32_0 : i32
    scf.if %2 {
      %cst_20 = arith.constant 0.000000e+00 : f32
      %57 = vector.broadcast %cst_20 : f32 to vector<1x128xf32>
      %c0_21 = arith.constant 0 : index
      %c0_22 = arith.constant 0 : index
      %58 = vector.load %arg6[%c0_21, %c0_22] : memref<1x128xf32, #tpu.memory_space<vmem>>, vector<1x128xf32>
      tpu.vector_store %arg6[%c0_21, %c0_22], %57 {strides = array<i32>} : memref<1x128xf32, #tpu.memory_space<vmem>>, vector<1x128xf32>,
    } else {
    }
    %c2_i32 = arith.constant 2 : i32
    %3 = arith.muli %arg0, %c2_i32 : i32
    %4 = arith.addi %3, %arg1 : i32
    %c512_i32 = arith.constant 512 : i32
    %5 = arith.muli %4, %c512_i32 : i32
    %6 = tpu.iota {dimensions = array<i32: 0>} : vector<512x1xi32>
    %7 = vector.broadcast %5 : i32 to vector<512x1xi32>
    %8 = arith.addi %6, %7 : vector<512x1xi32>
    %c1000_i32 = arith.constant 1000 : i32
    %9 = vector.broadcast %c1000_i32 : i32 to vector<512x1xi32>
    %10 = arith.cmpi slt, %8, %9 : vector<512x1xi32>
    %c0 = arith.constant 0 : index
    %c0_1 = arith.constant 0 : index
    %11 = vector.load %arg3[%c0, %c0_1] : memref<512x32xf32, #tpu.memory_space<vmem>>, vector<512x32xf32>
    %12 = arith.truncf %11 : vector<512x32xf32> to vector<512x32xbf16>
    %c0_2 = arith.constant 0 : index
    %c0_3 = arith.constant 0 : index
    %13 = vector.load %arg4[%c0_2, %c0_3] : memref<32x128xbf16, #tpu.memory_space<vmem>>, vector<32x128xbf16>
    %cst = arith.constant dense<0.000000e+00> : vector<512x128xf32>
    %14 = tpu.matmul %12, %13, %cst {dimension_numbers = #tpu.dot_dimension_numbers<[1], [0], [0], [1], [0, 0, 1, 1], [], []>} : vector<512x32xbf16>, vector<32x128xbf16>, vector<512x128xf32> -> vector<512x128xf32>
    %c0_4 = arith.constant 0 : index
    %c0_5 = arith.constant 0 : index
    %15 = vector.load %arg5[%c0_4, %c0_5] : memref<1x128xf32, #tpu.memory_space<vmem>>, vector<1x128xf32>
    %16 = vector.broadcast %15 : vector<1x128xf32> to vector<512x128xf32>
    %17 = arith.addf %14, %16 : vector<512x128xf32>
    %cst_6 = arith.constant dense<0xFF800000> : vector<512xf32>
    %18 = vector.multi_reduction <maximumf>, %17, %cst_6 [1] : vector<512x128xf32> to vector<512xf32>
    %19 = vector.shape_cast %18 : vector<512xf32> to vector<512x1xf32>
    %20 = vector.broadcast %19 : vector<512x1xf32> to vector<512x128xf32>
    %21 = arith.subf %17, %20 : vector<512x128xf32>
    %22 = math.exp %21 : vector<512x128xf32>
    %cst_7 = arith.constant dense<0.000000e+00> : vector<512xf32>
    %23 = vector.multi_reduction <add>, %22, %cst_7 [1] : vector<512x128xf32> to vector<512xf32>
    %24 = vector.shape_cast %23 : vector<512xf32> to vector<512x1xf32>
    %25 = math.log %24 : vector<512x1xf32>
    %26 = arith.addf %19, %25 : vector<512x1xf32>
    %c0_8 = arith.constant 0 : index
    %c0_9 = arith.constant 0 : index
    %27 = vector.load %arg2[%c0_8, %c0_9] : memref<512x2xi32, #tpu.memory_space<vmem>>, vector<512x1xi32>
    %c0_10 = arith.constant 0 : index
    %c1 = arith.constant 1 : index
    %28 = vector.load %arg2[%c0_10, %c1] : memref<512x2xi32, #tpu.memory_space<vmem>>, vector<512x1xi32>
    %29 = tpu.iota {dimensions = array<i32: 1>} : vector<512x128xi32>
    %30 = vector.broadcast %27 : vector<512x1xi32> to vector<512x128xi32>
    %31 = arith.cmpi eq, %29, %30 : vector<512x128xi32>
    %cst_11 = arith.constant 0.000000e+00 : f32
    %32 = vector.broadcast %cst_11 : f32 to vector<512x128xf32>
    %33 = arith.select %31, %17, %32 : vector<512x128xi1>, vector<512x128xf32>
    %cst_12 = arith.constant dense<0.000000e+00> : vector<512xf32>
    %34 = vector.multi_reduction <add>, %33, %cst_12 [1] : vector<512x128xf32> to vector<512xf32>
    %35 = vector.shape_cast %34 : vector<512xf32> to vector<512x1xf32>
    %36 = arith.subf %26, %35 : vector<512x1xf32>
    %cst_13 = arith.constant 9.99999996E-13 : f32
    %37 = vector.broadcast %cst_13 : f32 to vector<512x1xf32>
    %38 = arith.maximumf %36, %37 : vector<512x1xf32>
    %39 = tpu.reciprocal %38 {approx = true} : vector<512x1xf32> -> vector<512x1xf32>
    %40 = tpu.iota {dimensions = array<i32: 1>} : vector<512x128xi32>
    %41 = vector.broadcast %28 : vector<512x1xi32> to vector<512x128xi32>
    %42 = arith.cmpi eq, %40, %41 : vector<512x128xi32>
    %c127_i32 = arith.constant 127 : i32
    %43 = vector.broadcast %c127_i32 : i32 to vector<512x128xi32>
    %44 = arith.cmpi eq, %40, %43 : vector<512x128xi32>
    %45 = arith.ori %42, %44 : vector<512x128xi1>
    %46 = vector.broadcast %10 : vector<512x1xi1> to vector<512x128xi1>
    %47 = arith.andi %46, %45 : vector<512x128xi1>
    %cst_14 = arith.constant 0.000000e+00 : f32
    %48 = vector.shape_cast %39 : vector<512x1xf32> to vector<512x1xf32>
    %49 = vector.broadcast %48 : vector<512x1xf32> to vector<512x128xf32>
    %50 = vector.broadcast %cst_14 : f32 to vector<512x128xf32>
    %51 = arith.select %47, %49, %50 : vector<512x128xi1>, vector<512x128xf32>
    %c0_15 = arith.constant 0 : index
    %c0_16 = arith.constant 0 : index
    %52 = vector.load %arg6[%c0_15, %c0_16] : memref<1x128xf32, #tpu.memory_space<vmem>>, vector<1x128xf32>
    %cst_17 = arith.constant dense<0.000000e+00> : vector<128xf32>
    %53 = vector.multi_reduction <add>, %51, %cst_17 [0] : vector<512x128xf32> to vector<128xf32>
    %54 = vector.shape_cast %53 : vector<128xf32> to vector<1x128xf32>
    %55 = arith.addf %52, %54 : vector<1x128xf32>
    %c0_18 = arith.constant 0 : index
    %c0_19 = arith.constant 0 : index
    %56 = vector.load %arg6[%c0_18, %c0_19] : memref<1x128xf32, #tpu.memory_space<vmem>>, vector<1x128xf32>
    tpu.vector_store %arg6[%c0_18, %c0_19], %55 {strides = array<i32>} : memref<1x128xf32, #tpu.memory_space<vmem>>, vector<1x128xf32>,
    return
  }
  func.func @transform_0(%arg0: i32, %arg1: i32) -> (i32, i32) {
    %c2_i32 = arith.constant 2 : i32
    %0 = arith.muli %arg0, %c2_i32 : i32
    %1 = arith.addi %0, %arg1 : i32
    %c1_i32 = arith.constant 1 : i32
    %2 = arith.minsi %1, %c1_i32 : i32
    %c0_i32 = arith.constant 0 : i32
    %c0_i32_0 = arith.constant 0 : i32
    return %2, %c0_i32 : i32, i32
  }
  func.func @transform_1(%arg0: i32, %arg1: i32) -> (i32, i32) {
    %c2_i32 = arith.constant 2 : i32
    %0 = arith.muli %arg0, %c2_i32 : i32
    %1 = arith.addi %0, %arg1 : i32
    %c1_i32 = arith.constant 1 : i32
    %2 = arith.minsi %1, %c1_i32 : i32
    %c0_i32 = arith.constant 0 : i32
    %c0_i32_0 = arith.constant 0 : i32
    return %2, %c0_i32 : i32, i32
  }
  func.func @transform_2(%arg0: i32, %arg1: i32) -> (i32, i32) {
    %c0_i32 = arith.constant 0 : i32
    %c0_i32_0 = arith.constant 0 : i32
    %c0_i32_1 = arith.constant 0 : i32
    return %c0_i32, %c0_i32_0 : i32, i32
  }
  func.func @transform_3(%arg0: i32, %arg1: i32) -> (i32, i32) {
    %c0_i32 = arith.constant 0 : i32
    %c0_i32_0 = arith.constant 0 : i32
    %c0_i32_1 = arith.constant 0 : i32
    return %c0_i32, %c0_i32_0 : i32, i32
  }
  func.func @transform_4(%arg0: i32, %arg1: i32) -> (i32, i32) {
    %c0_i32 = arith.constant 0 : i32
    %c0_i32_0 = arith.constant 0 : i32
    return %c0_i32, %arg0 : i32, i32
  }
}

</mosaic_0001>

<llo_original>
// kernel: data_eval_sup_cls.1
$region0: #{data_eval_sup_cls.1}
  #allocation0 [shape = 'u32[]', space=smem, size = 0x4, offset = 0x4, fixed_abs, tag = 'smem constant byte address 0x4 - core index']
  #allocation1 [shape = 'u32[144,128]{1,0:T(1,128)}', space=vmem, size = 0x12000, scoped, tag = 'internal scratch']
  %s0 = inlined_call_operand.vmem [shape: s32[1000,2], index: 0, kind: input, shape index: {}]
  %s1 = inlined_call_operand.vmem [shape: f32[1000,32], index: 1, kind: input, shape index: {}]
  %s2 = inlined_call_operand.vmem [shape: bf16[32,128], index: 2, kind: input, shape index: {}]
  %s3 = inlined_call_operand.vmem [shape: f32[1,128], index: 3, kind: input, shape index: {}]
  %s4 = inlined_call_operand.vmem [shape: f32[1,128], index: 4, kind: output, shape index: {}]
  %s5 = sld [smem:[#allocation0]]
  $region53: #{data_eval_sup_cls.1} parent=0
    _
  %s7 = ssub.s32 1, %s5
  %s8 = scalar_select 0, %s7, %s5
  loop: start=0, step=1, limit=4
  $region2: #{data_eval_sup_cls.1} parent=0 // loop_pre_header
    _
  $region3: #{data_eval_sup_cls.1} parent=0 // loop_header
    %s10 = sphi 0, %s14
    %p11 = scmp.ge.s32.totalorder %s10, 4
    %s17 = sphi 0, %s29
    %s18 = sphi 0, %s25
    %s19 = sphi 0, %s17
    %s20 = sphi 0, %s18
    %s21 = sphi 0, %s19
    %s22 = sphi 0, %s20
    %s40 = sphi 0, %s42
    %s43 = sphi 0, %s40
    %s44 = sphi 0, %s43
    %s60 = sphi 0, %s44
    %s74 = sphi 0, %s76
    %s77 = sphi 0, %s74
    %s78 = sphi 0, %s77
    %s94 = sphi 0, %s78
    %s98 = sphi 0, %s98
    %s100 = sphi 0, %s98
    %s101 = sphi 0, %s100
    %s115 = sphi 0, %s101
    %s119 = sphi 0, %s119
    %s121 = sphi 0, %s119
    %s122 = sphi 0, %s121
    %s136 = sphi 0, %s122
    %s142 = sphi 0, %s144
    %s145 = sphi 0, %s142
    %s146 = sphi 0, %s145
    %s162 = sphi 0, %s146
  $region4: #{data_eval_sup_cls.1} parent=0 // loop_header_branch
    %13 = sbr.rel (%p11) target = $region8
  $region5: #{data_eval_sup_cls.1} parent=0 // loop_body
    %s15 = ssub.s32 %s10, 1
    %s16 = ssub.s32 %s10, 2
    %s23 = sadd.s32 1, %s18
    %p24 = scmp.ge.s32.totalorder %s23, 2
    %s25 = scalar_select %p24, 0, %s23
    %s26 = sadd.s32 1, %s17
    %s27 = scalar_select %p24, %s26, %s17
    %p28 = scmp.ge.s32.totalorder %s27, 1
    %s29 = scalar_select %p28, 0, %s27
    %s30 = smul.u32 %s17, 2
    %s31 = sadd.s32 %s30, %s18
    %p32 = scmp.lt.s32.totalorder %s31, 1
    %s33 = scalar_select %p32, %s31, 1
    %s34 = smul.u32 %s29, 2
    %s35 = sadd.s32 %s34, %s25
    %p36 = scmp.lt.s32.totalorder %s35, 1
    %s37 = scalar_select %p36, %s35, 1
    %s38 = ssub.s32 %s33, %s37
    %p39 = scmp.eq.s32.totalorder %s38, 0
    %s41 = sadd.s32 %s40, 1
    %s42 = scalar_select %p39, %s40, %s41
    %p45 = pneg %p39
    %p46 = scmp.eq.s32.totalorder %s10, 1
    %p47 = por %p45, %p46
    %p48 = scmp.ne.s32.totalorder %s40, %s43
    %p49 = scmp.eq.s32.totalorder %s10, 0
    %p50 = por %p48, %p49
    %p51 = scmp.ne.s32.totalorder %s40, %s43
    %p52 = scmp.eq.s32.totalorder %s15, 1
    %p53 = por %p51, %p52
    %p54 = scmp.ne.s32.totalorder %s43, %s44
    %p55 = scmp.eq.s32.totalorder %s15, 0
    %p56 = por %p54, %p55
    %p57 = scmp.ne.s32.totalorder %s43, %s44
    %p58 = scmp.eq.s32.totalorder %s16, 1
    %p59 = por %p57, %p58
    %p61 = scmp.ne.s32.totalorder %s44, %s60
    %p62 = scmp.eq.s32.totalorder %s16, 0
    %p63 = por %p61, %p62
    %s64 = smul.u32 %s17, 2
    %s65 = sadd.s32 %s64, %s18
    %p66 = scmp.lt.s32.totalorder %s65, 1
    %s67 = scalar_select %p66, %s65, 1
    %s68 = smul.u32 %s29, 2
    %s69 = sadd.s32 %s68, %s25
    %p70 = scmp.lt.s32.totalorder %s69, 1
    %s71 = scalar_select %p70, %s69, 1
    %s72 = ssub.s32 %s67, %s71
    %p73 = scmp.eq.s32.totalorder %s72, 0
    %s75 = sadd.s32 %s74, 1
    %s76 = scalar_select %p73, %s74, %s75
    %p79 = pneg %p73
    %p80 = scmp.eq.s32.totalorder %s10, 1
    %p81 = por %p79, %p80
    %p82 = scmp.ne.s32.totalorder %s74, %s77
    %p83 = scmp.eq.s32.totalorder %s10, 0
    %p84 = por %p82, %p83
    %p85 = scmp.ne.s32.totalorder %s74, %s77
    %p86 = scmp.eq.s32.totalorder %s15, 1
    %p87 = por %p85, %p86
    %p88 = scmp.ne.s32.totalorder %s77, %s78
    %p89 = scmp.eq.s32.totalorder %s15, 0
    %p90 = por %p88, %p89
    %p91 = scmp.ne.s32.totalorder %s77, %s78
    %p92 = scmp.eq.s32.totalorder %s16, 1
    %p93 = por %p91, %p92
    %p95 = scmp.ne.s32.totalorder %s78, %s94
    %p96 = scmp.eq.s32.totalorder %s16, 0
    %p97 = por %p95, %p96
    %s99 = sadd.s32 %s98, 1
    %p102 = scmp.eq.s32.totalorder %s10, 1
    %p103 = scmp.ne.s32.totalorder %s98, %s100
    %p104 = scmp.eq.s32.totalorder %s10, 0
    %p105 = por %p103, %p104
    %p106 = scmp.ne.s32.totalorder %s98, %s100
    %p107 = scmp.eq.s32.totalorder %s15, 1
    %p108 = por %p106, %p107
    %p109 = scmp.ne.s32.totalorder %s100, %s101
    %p110 = scmp.eq.s32.totalorder %s15, 0
    %p111 = por %p109, %p110
    %p112 = scmp.ne.s32.totalorder %s100, %s101
    %p113 = scmp.eq.s32.totalorder %s16, 1
    %p114 = por %p112, %p113
    %p116 = scmp.ne.s32.totalorder %s101, %s115
    %p117 = scmp.eq.s32.totalorder %s16, 0
    %p118 = por %p116, %p117
    %s120 = sadd.s32 %s119, 1
    %p123 = scmp.eq.s32.totalorder %s10, 1
    %p124 = scmp.ne.s32.totalorder %s119, %s121
    %p125 = scmp.eq.s32.totalorder %s10, 0
    %p126 = por %p124, %p125
    %p127 = scmp.ne.s32.totalorder %s119, %s121
    %p128 = scmp.eq.s32.totalorder %s15, 1
    %p129 = por %p127, %p128
    %p130 = scmp.ne.s32.totalorder %s121, %s122
    %p131 = scmp.eq.s32.totalorder %s15, 0
    %p132 = por %p130, %p131
    %p133 = scmp.ne.s32.totalorder %s121, %s122
    %p134 = scmp.eq.s32.totalorder %s16, 1
    %p135 = por %p133, %p134
    %p137 = scmp.ne.s32.totalorder %s122, %s136
    %p138 = scmp.eq.s32.totalorder %s16, 0
    %p139 = por %p137, %p138
    %s140 = ssub.s32 %s17, %s29
    %p141 = scmp.eq.s32.totalorder %s140, 0
    %s143 = sadd.s32 %s142, 1
    %s144 = scalar_select %p141, %s142, %s143
    %p147 = pneg %p141
    %p148 = scmp.eq.s32.totalorder %s10, 1
    %p149 = por %p147, %p148
    %p150 = scmp.ne.s32.totalorder %s142, %s145
    %p151 = scmp.eq.s32.totalorder %s10, 0
    %p152 = por %p150, %p151
    %p153 = scmp.ne.s32.totalorder %s142, %s145
    %p154 = scmp.eq.s32.totalorder %s15, 1
    %p155 = por %p153, %p154
    %p156 = scmp.ne.s32.totalorder %s145, %s146
    %p157 = scmp.eq.s32.totalorder %s15, 0
    %p158 = por %p156, %p157
    %p159 = scmp.ne.s32.totalorder %s145, %s146
    %p160 = scmp.eq.s32.totalorder %s16, 1
    %p161 = por %p159, %p160
    %p163 = scmp.ne.s32.totalorder %s146, %s162
    %p164 = scmp.eq.s32.totalorder %s16, 0
    %p165 = por %p163, %p164
    %p166 = scmp.le.s32.totalorder 1, %s10
    %p167 = scmp.lt.s32.totalorder %s10, 3
    %p168 = pnand %p166, %p167
    %p169 = pneg %p168
    // Predicated region
    $region9: #{data_eval_sup_cls.1} parent=5 // pred_check
      _
    $region10: #{data_eval_sup_cls.1} parent=5 // pred_check_branch
      %171 = sbr.rel (%p168) target = $region12
    $region11: #{data_eval_sup_cls.1} parent=5 // pred_region
      %s172 = ssub.s32 %s10, 1
      // Predicated region
      $region13: #{data_eval_sup_cls.1} parent=11 // pred_check
        %p173 = pneg %p111
      $region14: #{data_eval_sup_cls.1} parent=11 // pred_check_branch
        %175 = sbr.rel (%p173) target = $region16
      $region15: #{data_eval_sup_cls.1} parent=11 // pred_region
        _
      $region16: #{data_eval_sup_cls.1} parent=11 // pred_fallthru
        _
      // Predicated region
      $region17: #{data_eval_sup_cls.1} parent=11 // pred_check
        %p176 = pneg %p132
      $region18: #{data_eval_sup_cls.1} parent=11 // pred_check_branch
        %178 = sbr.rel (%p176) target = $region20
      $region19: #{data_eval_sup_cls.1} parent=11 // pred_region
        _
      $region20: #{data_eval_sup_cls.1} parent=11 // pred_fallthru
        _
    $region12: #{data_eval_sup_cls.1} parent=5 // pred_fallthru
      _
    %p179 = scmp.lt.s32.totalorder %s10, 2
    // Predicated region
    $region21: #{data_eval_sup_cls.1} parent=5 // pred_check
      %p180 = pneg %p179
    $region22: #{data_eval_sup_cls.1} parent=5 // pred_check_branch
      %182 = sbr.rel (%p180) target = $region24
    $region23: #{data_eval_sup_cls.1} parent=5 // pred_region
      // Predicated region
      $region25: #{data_eval_sup_cls.1} parent=23 // pred_check
        %p183 = pneg %p50
      $region26: #{data_eval_sup_cls.1} parent=23 // pred_check_branch
        %185 = sbr.rel (%p183) target = $region28
      $region27: #{data_eval_sup_cls.1} parent=23 // pred_region
        %s186 = smul.u32 %s17, 2
        %s187 = sadd.s32 %s186, %s18
        %p188 = scmp.lt.s32.totalorder %s187, 1
        %s189 = scalar_select %p188, %s187, 1
        %s190 = smul.u32 64, %s189
        %s191 = ssub.s32 125, %s190
        %p192 = scmp.lt.s32.totalorder %s191, 64
        %s193 = scalar_select %p192, %s191, 64
        %s194 = smul.u32 128, %s193
        %p195 = scmp.lt.s32.totalorder %s190, 124
        %s196 = scalar_select %p195, %s190, 124
        %s197 = smul.addr %s196, 8
        %s198 = scalar_lea.vmem %s0, %s197
        %s199 = smul.u32 %s17, 2
        %s200 = sadd.s32 %s199, %s18
        %p201 = scmp.lt.s32.totalorder %s200, 1
        %s202 = scalar_select %p201, %s200, 1
        %s203 = smul.u32 64, %s202
        %s204 = ssub.s32 125, %s203
        %p205 = scmp.lt.s32.totalorder %s204, 64
        %s206 = scalar_select %p205, %s204, 64
        %s207 = smul.u32 128, %s206
      $region28: #{data_eval_sup_cls.1} parent=23 // pred_fallthru
        _
      // Predicated region
      $region29: #{data_eval_sup_cls.1} parent=23 // pred_check
        %p208 = pneg %p84
      $region30: #{data_eval_sup_cls.1} parent=23 // pred_check_branch
        %210 = sbr.rel (%p208) target = $region32
      $region31: #{data_eval_sup_cls.1} parent=23 // pred_region
        %s211 = smul.u32 %s17, 2
        %s212 = sadd.s32 %s211, %s18
        %p213 = scmp.lt.s32.totalorder %s212, 1
        %s214 = scalar_select %p213, %s212, 1
        %s215 = smul.u32 64, %s214
        %s216 = ssub.s32 125, %s215
        %p217 = scmp.lt.s32.totalorder %s216, 64
        %s218 = scalar_select %p217, %s216, 64
        %s219 = smul.u32 128, %s218
        %p220 = scmp.lt.s32.totalorder %s215, 124
        %s221 = scalar_select %p220, %s215, 124
        %s222 = smul.addr %s221, 8
        %s223 = scalar_lea.vmem %s1, %s222
        %s224 = smul.u32 %s17, 2
        %s225 = sadd.s32 %s224, %s18
        %p226 = scmp.lt.s32.totalorder %s225, 1
        %s227 = scalar_select %p226, %s225, 1
        %s228 = smul.u32 64, %s227
        %s229 = ssub.s32 125, %s228
        %p230 = scmp.lt.s32.totalorder %s229, 64
        %s231 = scalar_select %p230, %s229, 64
        %s232 = smul.u32 128, %s231
      $region32: #{data_eval_sup_cls.1} parent=23 // pred_fallthru
        _
    $region24: #{data_eval_sup_cls.1} parent=5 // pred_fallthru
      _
    %p233 = scmp.le.s32.totalorder 1, %s10
    %p234 = scmp.lt.s32.totalorder %s10, 3
    %p235 = pnand %p233, %p234
    %p236 = pneg %p235
    // Predicated region
    $region33: #{data_eval_sup_cls.1} parent=5 // pred_check
      _
    $region34: #{data_eval_sup_cls.1} parent=5 // pred_check_branch
      %238 = sbr.rel (%p235) target = $region36
    $region35: #{data_eval_sup_cls.1} parent=5 // pred_region
      %s239 = ssub.s32 %s10, 1
      %s240 = smul.u32 %s19, 2
      %s241 = sadd.s32 %s240, %s20
      %p242 = scmp.lt.s32.totalorder %s241, 1
      %s243 = scalar_select %p242, %s241, 1
      %s244 = smul.u32 64, %s243
      %s245 = ssub.s32 125, %s244
      %p246 = scmp.lt.s32.totalorder %s245, 64
      %s247 = scalar_select %p246, %s245, 64
      %s248 = smul.u32 128, %s247
      %p249 = scmp.lt.s32.totalorder %s244, 124
      %s250 = scalar_select %p249, %s244, 124
      %s251 = smul.addr %s250, 8
      %s252 = scalar_lea.vmem %s0, %s251
      %p253 = pneg %p56
      %p254 = pneg %p53
      %s255 = smul.u32 %s19, 2
      %s256 = sadd.s32 %s255, %s20
      %p257 = scmp.lt.s32.totalorder %s256, 1
      %s258 = scalar_select %p257, %s256, 1
      %s259 = smul.u32 64, %s258
      %s260 = ssub.s32 125, %s259
      %p261 = scmp.lt.s32.totalorder %s260, 64
      %s262 = scalar_select %p261, %s260, 64
      %s263 = smul.u32 128, %s262
      %p264 = scmp.lt.s32.totalorder %s259, 124
      %s265 = scalar_select %p264, %s259, 124
      %s266 = smul.addr %s265, 8
      %s267 = scalar_lea.vmem %s1, %s266
      %p268 = pneg %p90
      %p269 = pneg %p87
      %p270 = pneg %p111
      %p271 = pneg %p108
      %p272 = pneg %p132
      %p273 = pneg %p129
      %p274 = pneg %p158
      %p275 = pneg %p155
      %p276 = scmp.lt.s32.totalorder %s19, 0
      %s277 = scalar_select %p276, %s19, 0
      %s278 = scalar_lea.vmem %s4, %s277
      %s279 = smul.u32 %s19, 2
      %s280 = sadd.s32 %s279, %s20
      %p281 = scmp.lt.s32.totalorder %s280, 1
      %s282 = scalar_select %p281, %s280, 1
      %s283 = smul.u32 64, %s282
      %s284 = ssub.s32 125, %s283
      %p285 = scmp.lt.s32.totalorder %s284, 64
      %s286 = scalar_select %p285, %s284, 64
      %s287 = smul.u32 128, %s286
      %p288 = scmp.lt.s32.totalorder %s283, 124
      %s289 = scalar_select %p288, %s283, 124
      %s290 = smul.addr %s289, 8
      %s291 = scalar_lea.vmem %s0, %s290
      %s292 = smul.u32 %s19, 2
      %s293 = sadd.s32 %s292, %s20
      %p294 = scmp.lt.s32.totalorder %s293, 1
      %s295 = scalar_select %p294, %s293, 1
      %s296 = smul.u32 64, %s295
      %s297 = ssub.s32 125, %s296
      %p298 = scmp.lt.s32.totalorder %s297, 64
      %s299 = scalar_select %p298, %s297, 64
      %s300 = smul.u32 128, %s299
      %s301 = smul.u32 %s19, 2
      %s302 = sadd.s32 %s301, %s20
      %p303 = scmp.lt.s32.totalorder %s302, 1
      %s304 = scalar_select %p303, %s302, 1
      %s305 = smul.u32 64, %s304
      %s306 = ssub.s32 125, %s305
      %p307 = scmp.lt.s32.totalorder %s306, 64
      %s308 = scalar_select %p307, %s306, 64
      %s309 = smul.u32 128, %s308
      %p310 = scmp.lt.s32.totalorder %s305, 124
      %s311 = scalar_select %p310, %s305, 124
      %s312 = smul.addr %s311, 8
      %s313 = scalar_lea.vmem %s1, %s312
      %s314 = smul.u32 %s19, 2
      %s315 = sadd.s32 %s314, %s20
      %p316 = scmp.lt.s32.totalorder %s315, 1
      %s317 = scalar_select %p316, %s315, 1
      %s318 = smul.u32 64, %s317
      %s319 = ssub.s32 125, %s318
      %p320 = scmp.lt.s32.totalorder %s319, 64
      %s321 = scalar_select %p320, %s319, 64
      %s322 = smul.u32 128, %s321
      %p323 = scmp.lt.s32.totalorder %s19, 0
      %s324 = scalar_select %p323, %s19, 0
      %s325 = scalar_lea.vmem %s4, %s324
      %p327 = scmp.eq.s32.totalorder %s20, 0
      // Predicated region
      $region37: #{data_eval_sup_cls.1} parent=35 // pred_check
        %p328 = pneg %p327
      $region38: #{data_eval_sup_cls.1} parent=35 // pred_check_branch
        %330 = sbr.rel (%p328) target = $region40
      $region39: #{data_eval_sup_cls.1} parent=35 // pred_region
        %331 = vst [vmem:[%s325] sm:$0x1] 0.0
      $region40: #{data_eval_sup_cls.1} parent=35 // pred_fallthru
        _
      %s332 = smul.u32 %s19, 2
      %s333 = sadd.s32 %s332, %s20
      %s334 = smul.u32 %s333, 512
      %v335 = vlaneseq
      %v336 = vshrl.u32 %v335, 7
      %v337 = vadd.s32 %v336, 8
      %v338 = vadd.s32 %v336, 16
      %v339 = vadd.s32 %v336, 24
      %v340 = vadd.s32 %v336, 32
      %v341 = vadd.s32 %v336, 40
      %v342 = vadd.s32 %v336, 48
      %v343 = vadd.s32 %v336, 56
      %v344 = vadd.s32 %v336, 64
      %v345 = vadd.s32 %v336, 72
      %v346 = vadd.s32 %v336, 80
      %v347 = vadd.s32 %v336, 88
      %v348 = vadd.s32 %v336, 96
      %v349 = vadd.s32 %v336, 104
      %v350 = vadd.s32 %v336, 112
      %v351 = vadd.s32 %v336, 120
      %v352 = vadd.s32 %v336, 128
      %v353 = vadd.s32 %v336, 136
      %v354 = vadd.s32 %v336, 144
      %v355 = vadd.s32 %v336, 152
      %v356 = vadd.s32 %v336, 160
      %v357 = vadd.s32 %v336, 168
      %v358 = vadd.s32 %v336, 176
      %v359 = vadd.s32 %v336, 184
      %v360 = vadd.s32 %v336, 192
      %v361 = vadd.s32 %v336, 200
      %v362 = vadd.s32 %v336, 208
      %v363 = vadd.s32 %v336, 216
      %v364 = vadd.s32 %v336, 224
      %v365 = vadd.s32 %v336, 232
      %v366 = vadd.s32 %v336, 240
      %v367 = vadd.s32 %v336, 248
      %v368 = vadd.s32 %v336, 256
      %v369 = vadd.s32 %v336, 264
      %v370 = vadd.s32 %v336, 272
      %v371 = vadd.s32 %v336, 280
      %v372 = vadd.s32 %v336, 288
      %v373 = vadd.s32 %v336, 296
      %v374 = vadd.s32 %v336, 304
      %v375 = vadd.s32 %v336, 312
      %v376 = vadd.s32 %v336, 320
      %v377 = vadd.s32 %v336, 328
      %v378 = vadd.s32 %v336, 336
      %v379 = vadd.s32 %v336, 344
      %v380 = vadd.s32 %v336, 352
      %v381 = vadd.s32 %v336, 360
      %v382 = vadd.s32 %v336, 368
      %v383 = vadd.s32 %v336, 376
      %v384 = vadd.s32 %v336, 384
      %v385 = vadd.s32 %v336, 392
      %v386 = vadd.s32 %v336, 400
      %v387 = vadd.s32 %v336, 408
      %v388 = vadd.s32 %v336, 416
      %v389 = vadd.s32 %v336, 424
      %v390 = vadd.s32 %v336, 432
      %v391 = vadd.s32 %v336, 440
      %v392 = vadd.s32 %v336, 448
      %v393 = vadd.s32 %v336, 456
      %v394 = vadd.s32 %v336, 464
      %v395 = vadd.s32 %v336, 472
      %v396 = vadd.s32 %v336, 480
      %v397 = vadd.s32 %v336, 488
      %v398 = vadd.s32 %v336, 496
      %v399 = vadd.s32 %v336, 504
      %v400 = vstv %s334
      %v401 = vadd.s32 %v336, %v400
      %v402 = vadd.s32 %v337, %v400
      %v403 = vadd.s32 %v338, %v400
      %v404 = vadd.s32 %v339, %v400
      %v405 = vadd.s32 %v340, %v400
      %v406 = vadd.s32 %v341, %v400
      %v407 = vadd.s32 %v342, %v400
      %v408 = vadd.s32 %v343, %v400
      %v409 = vadd.s32 %v344, %v400
      %v410 = vadd.s32 %v345, %v400
      %v411 = vadd.s32 %v346, %v400
      %v412 = vadd.s32 %v347, %v400
      %v413 = vadd.s32 %v348, %v400
      %v414 = vadd.s32 %v349, %v400
      %v415 = vadd.s32 %v350, %v400
      %v416 = vadd.s32 %v351, %v400
      %v417 = vadd.s32 %v352, %v400
      %v418 = vadd.s32 %v353, %v400
      %v419 = vadd.s32 %v354, %v400
      %v420 = vadd.s32 %v355, %v400
      %v421 = vadd.s32 %v356, %v400
      %v422 = vadd.s32 %v357, %v400
      %v423 = vadd.s32 %v358, %v400
      %v424 = vadd.s32 %v359, %v400
      %v425 = vadd.s32 %v360, %v400
      %v426 = vadd.s32 %v361, %v400
      %v427 = vadd.s32 %v362, %v400
      %v428 = vadd.s32 %v363, %v400
      %v429 = vadd.s32 %v364, %v400
      %v430 = vadd.s32 %v365, %v400
      %v431 = vadd.s32 %v366, %v400
      %v432 = vadd.s32 %v367, %v400
      %v433 = vadd.s32 %v368, %v400
      %v434 = vadd.s32 %v369, %v400
      %v435 = vadd.s32 %v370, %v400
      %v436 = vadd.s32 %v371, %v400
      %v437 = vadd.s32 %v372, %v400
      %v438 = vadd.s32 %v373, %v400
      %v439 = vadd.s32 %v374, %v400
      %v440 = vadd.s32 %v375, %v400
      %v441 = vadd.s32 %v376, %v400
      %v442 = vadd.s32 %v377, %v400
      %v443 = vadd.s32 %v378, %v400
      %v444 = vadd.s32 %v379, %v400
      %v445 = vadd.s32 %v380, %v400
      %v446 = vadd.s32 %v381, %v400
      %v447 = vadd.s32 %v382, %v400
      %v448 = vadd.s32 %v383, %v400
      %v449 = vadd.s32 %v384, %v400
      %v450 = vadd.s32 %v385, %v400
      %v451 = vadd.s32 %v386, %v400
      %v452 = vadd.s32 %v387, %v400
      %v453 = vadd.s32 %v388, %v400
      %v454 = vadd.s32 %v389, %v400
      %v455 = vadd.s32 %v390, %v400
      %v456 = vadd.s32 %v391, %v400
      %v457 = vadd.s32 %v392, %v400
      %v458 = vadd.s32 %v393, %v400
      %v459 = vadd.s32 %v394, %v400
      %v460 = vadd.s32 %v395, %v400
      %v461 = vadd.s32 %v396, %v400
      %v462 = vadd.s32 %v397, %v400
      %v463 = vadd.s32 %v398, %v400
      %v464 = vadd.s32 %v399, %v400
      %vm465 = vcmp.lt.s32.totalorder %v401, 1000
      %vm466 = vcmp.lt.s32.totalorder %v402, 1000
      %vm467 = vcmp.lt.s32.totalorder %v403, 1000
      %vm468 = vcmp.lt.s32.totalorder %v404, 1000
      %vm469 = vcmp.lt.s32.totalorder %v405, 1000
      %vm470 = vcmp.lt.s32.totalorder %v406, 1000
      %vm471 = vcmp.lt.s32.totalorder %v407, 1000
      %vm472 = vcmp.lt.s32.totalorder %v408, 1000
      %vm473 = vcmp.lt.s32.totalorder %v409, 1000
      %vm474 = vcmp.lt.s32.totalorder %v410, 1000
      %vm475 = vcmp.lt.s32.totalorder %v411, 1000
      %vm476 = vcmp.lt.s32.totalorder %v412, 1000
      %vm477 = vcmp.lt.s32.totalorder %v413, 1000
      %vm478 = vcmp.lt.s32.totalorder %v414, 1000
      %vm479 = vcmp.lt.s32.totalorder %v415, 1000
      %vm480 = vcmp.lt.s32.totalorder %v416, 1000
      %vm481 = vcmp.lt.s32.totalorder %v417, 1000
      %vm482 = vcmp.lt.s32.totalorder %v418, 1000
      %vm483 = vcmp.lt.s32.totalorder %v419, 1000
      %vm484 = vcmp.lt.s32.totalorder %v420, 1000
      %vm485 = vcmp.lt.s32.totalorder %v421, 1000
      %vm486 = vcmp.lt.s32.totalorder %v422, 1000
      %vm487 = vcmp.lt.s32.totalorder %v423, 1000
      %vm488 = vcmp.lt.s32.totalorder %v424, 1000
      %vm489 = vcmp.lt.s32.totalorder %v425, 1000
      %vm490 = vcmp.lt.s32.totalorder %v426, 1000
      %vm491 = vcmp.lt.s32.totalorder %v427, 1000
      %vm492 = vcmp.lt.s32.totalorder %v428, 1000
      %vm493 = vcmp.lt.s32.totalorder %v429, 1000
      %vm494 = vcmp.lt.s32.totalorder %v430, 1000
      %vm495 = vcmp.lt.s32.totalorder %v431, 1000
      %vm496 = vcmp.lt.s32.totalorder %v432, 1000
      %vm497 = vcmp.lt.s32.totalorder %v433, 1000
      %vm498 = vcmp.lt.s32.totalorder %v434, 1000
      %vm499 = vcmp.lt.s32.totalorder %v435, 1000
      %vm500 = vcmp.lt.s32.totalorder %v436, 1000
      %vm501 = vcmp.lt.s32.totalorder %v437, 1000
      %vm502 = vcmp.lt.s32.totalorder %v438, 1000
      %vm503 = vcmp.lt.s32.totalorder %v439, 1000
      %vm504 = vcmp.lt.s32.totalorder %v440, 1000
      %vm505 = vcmp.lt.s32.totalorder %v441, 1000
      %vm506 = vcmp.lt.s32.totalorder %v442, 1000
      %vm507 = vcmp.lt.s32.totalorder %v443, 1000
      %vm508 = vcmp.lt.s32.totalorder %v444, 1000
      %vm509 = vcmp.lt.s32.totalorder %v445, 1000
      %vm510 = vcmp.lt.s32.totalorder %v446, 1000
      %vm511 = vcmp.lt.s32.totalorder %v447, 1000
      %vm512 = vcmp.lt.s32.totalorder %v448, 1000
      %vm513 = vcmp.lt.s32.totalorder %v449, 1000
      %vm514 = vcmp.lt.s32.totalorder %v450, 1000
      %vm515 = vcmp.lt.s32.totalorder %v451, 1000
      %vm516 = vcmp.lt.s32.totalorder %v452, 1000
      %vm517 = vcmp.lt.s32.totalorder %v453, 1000
      %vm518 = vcmp.lt.s32.totalorder %v454, 1000
      %vm519 = vcmp.lt.s32.totalorder %v455, 1000
      %vm520 = vcmp.lt.s32.totalorder %v456, 1000
      %vm521 = vcmp.lt.s32.totalorder %v457, 1000
      %vm522 = vcmp.lt.s32.totalorder %v458, 1000
      %vm523 = vcmp.lt.s32.totalorder %v459, 1000
      %vm524 = vcmp.lt.s32.totalorder %v460, 1000
      %vm525 = vcmp.lt.s32.totalorder %v461, 1000
      %vm526 = vcmp.lt.s32.totalorder %v462, 1000
      %vm527 = vcmp.lt.s32.totalorder %v463, 1000
      %vm528 = vcmp.lt.s32.totalorder %v464, 1000
      %v529 = vld [vmem:[%s313] sm:$0xff]
      %v530 = vld [vmem:[%s313 + $0x8] sm:$0xff]
      %v531 = vld [vmem:[%s313 + $0x10] sm:$0xff]
      %v532 = vld [vmem:[%s313 + $0x18] sm:$0xff]
      %v533 = vld [vmem:[%s313 + $0x20] sm:$0xff]
      %v534 = vld [vmem:[%s313 + $0x28] sm:$0xff]
      %v535 = vld [vmem:[%s313 + $0x30] sm:$0xff]
      %v536 = vld [vmem:[%s313 + $0x38] sm:$0xff]
      %v537 = vld [vmem:[%s313 + $0x40] sm:$0xff]
      %v538 = vld [vmem:[%s313 + $0x48] sm:$0xff]
      %v539 = vld [vmem:[%s313 + $0x50] sm:$0xff]
      %v540 = vld [vmem:[%s313 + $0x58] sm:$0xff]
      %v541 = vld [vmem:[%s313 + $0x60] sm:$0xff]
      %v542 = vld [vmem:[%s313 + $0x68] sm:$0xff]
      %v543 = vld [vmem:[%s313 + $0x70] sm:$0xff]
      %v544 = vld [vmem:[%s313 + $0x78] sm:$0xff]
      %v545 = vld [vmem:[%s313 + $0x80] sm:$0xff]
      %v546 = vld [vmem:[%s313 + $0x88] sm:$0xff]
      %v547 = vld [vmem:[%s313 + $0x90] sm:$0xff]
      %v548 = vld [vmem:[%s313 + $0x98] sm:$0xff]
      %v549 = vld [vmem:[%s313 + $0xa0] sm:$0xff]
      %v550 = vld [vmem:[%s313 + $0xa8] sm:$0xff]
      %v551 = vld [vmem:[%s313 + $0xb0] sm:$0xff]
      %v552 = vld [vmem:[%s313 + $0xb8] sm:$0xff]
      %v553 = vld [vmem:[%s313 + $0xc0] sm:$0xff]
      %v554 = vld [vmem:[%s313 + $0xc8] sm:$0xff]
      %v555 = vld [vmem:[%s313 + $0xd0] sm:$0xff]
      %v556 = vld [vmem:[%s313 + $0xd8] sm:$0xff]
      %v557 = vld [vmem:[%s313 + $0xe0] sm:$0xff]
      %v558 = vld [vmem:[%s313 + $0xe8] sm:$0xff]
      %v559 = vld [vmem:[%s313 + $0xf0] sm:$0xff]
      %v560 = vld [vmem:[%s313 + $0xf8] sm:$0xff]
      %v561 = vld [vmem:[%s313 + $0x100] sm:$0xff]
      %v562 = vld [vmem:[%s313 + $0x108] sm:$0xff]
      %v563 = vld [vmem:[%s313 + $0x110] sm:$0xff]
      %v564 = vld [vmem:[%s313 + $0x118] sm:$0xff]
      %v565 = vld [vmem:[%s313 + $0x120] sm:$0xff]
      %v566 = vld [vmem:[%s313 + $0x128] sm:$0xff]
      %v567 = vld [vmem:[%s313 + $0x130] sm:$0xff]
      %v568 = vld [vmem:[%s313 + $0x138] sm:$0xff]
      %v569 = vld [vmem:[%s313 + $0x140] sm:$0xff]
      %v570 = vld [vmem:[%s313 + $0x148] sm:$0xff]
      %v571 = vld [vmem:[%s313 + $0x150] sm:$0xff]
      %v572 = vld [vmem:[%s313 + $0x158] sm:$0xff]
      %v573 = vld [vmem:[%s313 + $0x160] sm:$0xff]
      %v574 = vld [vmem:[%s313 + $0x168] sm:$0xff]
      %v575 = vld [vmem:[%s313 + $0x170] sm:$0xff]
      %v576 = vld [vmem:[%s313 + $0x178] sm:$0xff]
      %v577 = vld [vmem:[%s313 + $0x180] sm:$0xff]
      %v578 = vld [vmem:[%s313 + $0x188] sm:$0xff]
      %v579 = vld [vmem:[%s313 + $0x190] sm:$0xff]
      %v580 = vld [vmem:[%s313 + $0x198] sm:$0xff]
      %v581 = vld [vmem:[%s313 + $0x1a0] sm:$0xff]
      %v582 = vld [vmem:[%s313 + $0x1a8] sm:$0xff]
      %v583 = vld [vmem:[%s313 + $0x1b0] sm:$0xff]
      %v584 = vld [vmem:[%s313 + $0x1b8] sm:$0xff]
      %v585 = vld [vmem:[%s313 + $0x1c0] sm:$0xff]
      %v586 = vld [vmem:[%s313 + $0x1c8] sm:$0xff]
      %v587 = vld [vmem:[%s313 + $0x1d0] sm:$0xff]
      %v588 = vld [vmem:[%s313 + $0x1d8] sm:$0xff]
      %v589 = vld [vmem:[%s313 + $0x1e0] sm:$0xff]
      %v590 = vld [vmem:[%s313 + $0x1e8] sm:$0xff]
      %v591 = vld [vmem:[%s313 + $0x1f0] sm:$0xff]
      %v592 = vld [vmem:[%s313 + $0x1f8] sm:$0xff]
      %v593 = vpack.c.bf16 %v530, %v529
      %v594 = vpack.c.bf16 %v532, %v531
      %v595 = vpack.c.bf16 %v534, %v533
      %v596 = vpack.c.bf16 %v536, %v535
      %v597 = vpack.c.bf16 %v538, %v537
      %v598 = vpack.c.bf16 %v540, %v539
      %v599 = vpack.c.bf16 %v542, %v541
      %v600 = vpack.c.bf16 %v544, %v543
      %v601 = vpack.c.bf16 %v546, %v545
      %v602 = vpack.c.bf16 %v548, %v547
      %v603 = vpack.c.bf16 %v550, %v549
      %v604 = vpack.c.bf16 %v552, %v551
      %v605 = vpack.c.bf16 %v554, %v553
      %v606 = vpack.c.bf16 %v556, %v555
      %v607 = vpack.c.bf16 %v558, %v557
      %v608 = vpack.c.bf16 %v560, %v559
      %v609 = vpack.c.bf16 %v562, %v561
      %v610 = vpack.c.bf16 %v564, %v563
      %v611 = vpack.c.bf16 %v566, %v565
      %v612 = vpack.c.bf16 %v568, %v567
      %v613 = vpack.c.bf16 %v570, %v569
      %v614 = vpack.c.bf16 %v572, %v571
      %v615 = vpack.c.bf16 %v574, %v573
      %v616 = vpack.c.bf16 %v576, %v575
      %v617 = vpack.c.bf16 %v578, %v577
      %v618 = vpack.c.bf16 %v580, %v579
      %v619 = vpack.c.bf16 %v582, %v581
      %v620 = vpack.c.bf16 %v584, %v583
      %v621 = vpack.c.bf16 %v586, %v585
      %v622 = vpack.c.bf16 %v588, %v587
      %v623 = vpack.c.bf16 %v590, %v589
      %v624 = vpack.c.bf16 %v592, %v591
      %v625 = vld [vmem:[%s2] sm:$0xf]
      %v626 = vld [vmem:[%s2 + $0x4] sm:$0xf]
      %v627 = vld [vmem:[%s2 + $0x8] sm:$0xf]
      %v628 = vld [vmem:[%s2 + $0xc] sm:$0xf]
      %v629 = vld [vmem:[%s3] sm:$0x1]
      %v631 = vlaneseq
      %v632 = vshrl.u32 %v631, 7
      %v633 = vsub.s32 0, %v632
      %v634 = vrot.slane %v629, %v633
      %v640 = vunpack.c.l.b16 %v625
      %v641 = vunpack.c.l.b16 %v626
      %v642 = vunpack.c.l.b16 %v627
      %v643 = vunpack.c.l.b16 %v628
      %v644 = vpack.c.b16 %v641, %v640
      %v645 = vpack.c.b16 %v643, %v642
      %vm648 = vcmask 261120
      %v650 = vsel %vm648, %v593, 0
      %v653 = vsel %vm648, %v594, 0
      %v656 = vsel %vm648, %v595, 0
      %v659 = vsel %vm648, %v596, 0
      %v662 = vsel %vm648, %v597, 0
      %v665 = vsel %vm648, %v598, 0
      %v668 = vsel %vm648, %v599, 0
      %v671 = vsel %vm648, %v600, 0
      %v674 = vsel %vm648, %v601, 0
      %v677 = vsel %vm648, %v602, 0
      %v680 = vsel %vm648, %v603, 0
      %v683 = vsel %vm648, %v604, 0
      %v686 = vsel %vm648, %v605, 0
      %v689 = vsel %vm648, %v606, 0
      %v692 = vsel %vm648, %v607, 0
      %v695 = vsel %vm648, %v608, 0
      %v698 = vsel %vm648, %v609, 0
      %v701 = vsel %vm648, %v610, 0
      %v704 = vsel %vm648, %v611, 0
      %v707 = vsel %vm648, %v612, 0
      %v710 = vsel %vm648, %v613, 0
      %v713 = vsel %vm648, %v614, 0
      %v716 = vsel %vm648, %v615, 0
      %v719 = vsel %vm648, %v616, 0
      %v722 = vsel %vm648, %v617, 0
      %v725 = vsel %vm648, %v618, 0
      %v728 = vsel %vm648, %v619, 0
      %v731 = vsel %vm648, %v620, 0
      %v734 = vsel %vm648, %v621, 0
      %v737 = vsel %vm648, %v622, 0
      %v740 = vsel %vm648, %v623, 0
      %v743 = vsel %vm648, %v624, 0
      %745 = vmatprep.subr.bf16.mxu0 0
      %746 = vmatpush1.bf16.msra.mxu0 %v644
      %747 = vmatprep.subr.bf16.mxu0 0
      %748 = vmatpush1.bf16.msra.mxu0 %v645
      %749 = vmatprep.subr.bf16.mxu0 0
      %750 = vmatpush1.bf16.msra.mxu0 0
      %751 = vmatprep.subr.bf16.mxu0 0
      %752 = vmatpush1.bf16.msra.mxu0 0
      %753 = vmatprep.subr.bf16.mxu0 0
      %754 = vmatpush1.bf16.msra.mxu0 0
      %755 = vmatprep.subr.bf16.mxu0 0
      %756 = vmatpush1.bf16.msra.mxu0 0
      %757 = vmatprep.subr.bf16.mxu0 0
      %758 = vmatpush1.bf16.msra.mxu0 0
      %759 = vmatprep.subr.bf16.mxu0 0
      %760 = vmatpush1.bf16.msra.mxu0 0
      %761 = vmatprep.subr.bf16.mxu0 0
      %762 = vmatpush1.bf16.msra.mxu0 0
      %763 = vmatprep.subr.bf16.mxu0 0
      %764 = vmatpush1.bf16.msra.mxu0 0
      %765 = vmatprep.subr.bf16.mxu0 0
      %766 = vmatpush1.bf16.msra.mxu0 0
      %767 = vmatprep.subr.bf16.mxu0 0
      %768 = vmatpush1.bf16.msra.mxu0 0
      %769 = vmatprep.subr.bf16.mxu0 0
      %770 = vmatpush1.bf16.msra.mxu0 0
      %771 = vmatprep.subr.bf16.mxu0 0
      %772 = vmatpush1.bf16.msra.mxu0 0
      %773 = vmatprep.subr.bf16.mxu0 0
      %774 = vmatpush1.bf16.msra.mxu0 0
      %775 = vmatprep.subr.bf16.mxu0 0
      %776 = vmatpush1.bf16.msra.mxu0 0
      %777 = vmatprep.mubr.bf16.mxu0 0
      %778 = vmatmul.mubr.bf16.gmra.mrb[0].mxu0 %v650
      %v779 = vpop.f32.mrb[0].mxu0
      %v780 = vadd.f32 %v634, %v779
      %v781 = vpop.f32.mrb[0].mxu0
      %v782 = vpop.f32.mrb[0].mxu0
      %v783 = vadd.f32 %v634, %v782
      %v784 = vpop.f32.mrb[0].mxu0
      %785 = vmatprep.mubr.bf16.mxu0 0
      %786 = vmatmul.mubr.bf16.gmra.mrb[0].mxu0 %v653
      %v787 = vpop.f32.mrb[0].mxu0
      %v788 = vadd.f32 %v634, %v787
      %v789 = vpop.f32.mrb[0].mxu0
      %v790 = vpop.f32.mrb[0].mxu0
      %v791 = vadd.f32 %v634, %v790
      %v792 = vpop.f32.mrb[0].mxu0
      %793 = vmatprep.mubr.bf16.mxu0 0
      %794 = vmatmul.mubr.bf16.gmra.mrb[0].mxu0 %v656
      %v795 = vpop.f32.mrb[0].mxu0
      %v796 = vadd.f32 %v634, %v795
      %v797 = vpop.f32.mrb[0].mxu0
      %v798 = vpop.f32.mrb[0].mxu0
      %v799 = vadd.f32 %v634, %v798
      %v800 = vpop.f32.mrb[0].mxu0
      %801 = vmatprep.mubr.bf16.mxu0 0
      %802 = vmatmul.mubr.bf16.gmra.mrb[0].mxu0 %v659
      %v803 = vpop.f32.mrb[0].mxu0
      %v804 = vadd.f32 %v634, %v803
      %v805 = vpop.f32.mrb[0].mxu0
      %v806 = vpop.f32.mrb[0].mxu0
      %v807 = vadd.f32 %v634, %v806
      %v808 = vpop.f32.mrb[0].mxu0
      %809 = vmatprep.mubr.bf16.mxu0 0
      %810 = vmatmul.mubr.bf16.gmra.mrb[0].mxu0 %v662
      %v811 = vpop.f32.mrb[0].mxu0
      %v812 = vadd.f32 %v634, %v811
      %v813 = vpop.f32.mrb[0].mxu0
      %v814 = vpop.f32.mrb[0].mxu0
      %v815 = vadd.f32 %v634, %v814
      %v816 = vpop.f32.mrb[0].mxu0
      %817 = vmatprep.mubr.bf16.mxu0 0
      %818 = vmatmul.mubr.bf16.gmra.mrb[0].mxu0 %v665
      %v819 = vpop.f32.mrb[0].mxu0
      %v820 = vadd.f32 %v634, %v819
      %v821 = vpop.f32.mrb[0].mxu0
      %v822 = vpop.f32.mrb[0].mxu0
      %v823 = vadd.f32 %v634, %v822
      %v824 = vpop.f32.mrb[0].mxu0
      %825 = vmatprep.mubr.bf16.mxu0 0
      %826 = vmatmul.mubr.bf16.gmra.mrb[0].mxu0 %v668
      %v827 = vpop.f32.mrb[0].mxu0
      %v828 = vadd.f32 %v634, %v827
      %v829 = vpop.f32.mrb[0].mxu0
      %v830 = vpop.f32.mrb[0].mxu0
      %v831 = vadd.f32 %v634, %v830
      %v832 = vpop.f32.mrb[0].mxu0
      %833 = vmatprep.mubr.bf16.mxu0 0
      %834 = vmatmul.mubr.bf16.gmra.mrb[0].mxu0 %v671
      %v835 = vpop.f32.mrb[0].mxu0
      %v836 = vadd.f32 %v634, %v835
      %v837 = vpop.f32.mrb[0].mxu0
      %v838 = vpop.f32.mrb[0].mxu0
      %v839 = vadd.f32 %v634, %v838
      %v840 = vpop.f32.mrb[0].mxu0
      %841 = vmatprep.mubr.bf16.mxu0 0
      %842 = vmatmul.mubr.bf16.gmra.mrb[0].mxu0 %v674
      %v843 = vpop.f32.mrb[0].mxu0
      %v844 = vadd.f32 %v634, %v843
      %v845 = vpop.f32.mrb[0].mxu0
      %v846 = vpop.f32.mrb[0].mxu0
      %v847 = vadd.f32 %v634, %v846
      %v848 = vpop.f32.mrb[0].mxu0
      %849 = vmatprep.mubr.bf16.mxu0 0
      %850 = vmatmul.mubr.bf16.gmra.mrb[0].mxu0 %v677
      %v851 = vpop.f32.mrb[0].mxu0
      %v852 = vadd.f32 %v634, %v851
      %v853 = vpop.f32.mrb[0].mxu0
      %v854 = vpop.f32.mrb[0].mxu0
      %v855 = vadd.f32 %v634, %v854
      %v856 = vpop.f32.mrb[0].mxu0
      %857 = vmatprep.mubr.bf16.mxu0 0
      %858 = vmatmul.mubr.bf16.gmra.mrb[0].mxu0 %v680
      %v859 = vpop.f32.mrb[0].mxu0
      %v860 = vadd.f32 %v634, %v859
      %v861 = vpop.f32.mrb[0].mxu0
      %v862 = vpop.f32.mrb[0].mxu0
      %v863 = vadd.f32 %v634, %v862
      %v864 = vpop.f32.mrb[0].mxu0
      %865 = vmatprep.mubr.bf16.mxu0 0
      %866 = vmatmul.mubr.bf16.gmra.mrb[0].mxu0 %v683
      %v867 = vpop.f32.mrb[0].mxu0
      %v868 = vadd.f32 %v634, %v867
      %v869 = vpop.f32.mrb[0].mxu0
      %v870 = vpop.f32.mrb[0].mxu0
      %v871 = vadd.f32 %v634, %v870
      %v872 = vpop.f32.mrb[0].mxu0
      %873 = vmatprep.mubr.bf16.mxu0 0
      %874 = vmatmul.mubr.bf16.gmra.mrb[0].mxu0 %v686
      %v875 = vpop.f32.mrb[0].mxu0
      %v876 = vadd.f32 %v634, %v875
      %v877 = vpop.f32.mrb[0].mxu0
      %v878 = vpop.f32.mrb[0].mxu0
      %v879 = vadd.f32 %v634, %v878
      %v880 = vpop.f32.mrb[0].mxu0
      %881 = vmatprep.mubr.bf16.mxu0 0
      %882 = vmatmul.mubr.bf16.gmra.mrb[0].mxu0 %v689
      %v883 = vpop.f32.mrb[0].mxu0
      %v884 = vadd.f32 %v634, %v883
      %v885 = vpop.f32.mrb[0].mxu0
      %v886 = vpop.f32.mrb[0].mxu0
      %v887 = vadd.f32 %v634, %v886
      %v888 = vpop.f32.mrb[0].mxu0
      %889 = vmatprep.mubr.bf16.mxu0 0
      %890 = vmatmul.mubr.bf16.gmra.mrb[0].mxu0 %v692
      %v891 = vpop.f32.mrb[0].mxu0
      %v892 = vadd.f32 %v634, %v891
      %v893 = vpop.f32.mrb[0].mxu0
      %v894 = vpop.f32.mrb[0].mxu0
      %v895 = vadd.f32 %v634, %v894
      %v896 = vpop.f32.mrb[0].mxu0
      %897 = vmatprep.mubr.bf16.mxu0 0
      %898 = vmatmul.mubr.bf16.gmra.mrb[0].mxu0 %v695
      %v899 = vpop.f32.mrb[0].mxu0
      %v900 = vadd.f32 %v634, %v899
      %v901 = vpop.f32.mrb[0].mxu0
      %v902 = vpop.f32.mrb[0].mxu0
      %v903 = vadd.f32 %v634, %v902
      %v904 = vpop.f32.mrb[0].mxu0
      %905 = vmatprep.mubr.bf16.mxu0 0
      %906 = vmatmul.mubr.bf16.gmra.mrb[0].mxu0 %v698
      %v907 = vpop.f32.mrb[0].mxu0
      %v908 = vadd.f32 %v634, %v907
      %v909 = vpop.f32.mrb[0].mxu0
      %v910 = vpop.f32.mrb[0].mxu0
      %v911 = vadd.f32 %v634, %v910
      %v912 = vpop.f32.mrb[0].mxu0
      %913 = vmatprep.mubr.bf16.mxu0 0
      %914 = vmatmul.mubr.bf16.gmra.mrb[0].mxu0 %v701
      %v915 = vpop.f32.mrb[0].mxu0
      %v916 = vadd.f32 %v634, %v915
      %v917 = vpop.f32.mrb[0].mxu0
      %v918 = vpop.f32.mrb[0].mxu0
      %v919 = vadd.f32 %v634, %v918
      %v920 = vpop.f32.mrb[0].mxu0
      %921 = vmatprep.mubr.bf16.mxu0 0
      %922 = vmatmul.mubr.bf16.gmra.mrb[0].mxu0 %v704
      %v923 = vpop.f32.mrb[0].mxu0
      %v924 = vadd.f32 %v634, %v923
      %v925 = vpop.f32.mrb[0].mxu0
      %v926 = vpop.f32.mrb[0].mxu0
      %v927 = vadd.f32 %v634, %v926
      %v928 = vpop.f32.mrb[0].mxu0
      %929 = vmatprep.mubr.bf16.mxu0 0
      %930 = vmatmul.mubr.bf16.gmra.mrb[0].mxu0 %v707
      %v931 = vpop.f32.mrb[0].mxu0
      %v932 = vadd.f32 %v634, %v931
      %v933 = vpop.f32.mrb[0].mxu0
      %v934 = vpop.f32.mrb[0].mxu0
      %v935 = vadd.f32 %v634, %v934
      %v936 = vpop.f32.mrb[0].mxu0
      %937 = vmatprep.mubr.bf16.mxu0 0
      %938 = vmatmul.mubr.bf16.gmra.mrb[0].mxu0 %v710
      %v939 = vpop.f32.mrb[0].mxu0
      %v940 = vadd.f32 %v634, %v939
      %v941 = vpop.f32.mrb[0].mxu0
      %v942 = vpop.f32.mrb[0].mxu0
      %v943 = vadd.f32 %v634, %v942
      %v944 = vpop.f32.mrb[0].mxu0
      %945 = vmatprep.mubr.bf16.mxu0 0
      %946 = vmatmul.mubr.bf16.gmra.mrb[0].mxu0 %v713
      %v947 = vpop.f32.mrb[0].mxu0
      %v948 = vadd.f32 %v634, %v947
      %v949 = vpop.f32.mrb[0].mxu0
      %v950 = vpop.f32.mrb[0].mxu0
      %v951 = vadd.f32 %v634, %v950
      %v952 = vpop.f32.mrb[0].mxu0
      %953 = vmatprep.mubr.bf16.mxu0 0
      %954 = vmatmul.mubr.bf16.gmra.mrb[0].mxu0 %v716
      %v955 = vpop.f32.mrb[0].mxu0
      %v956 = vadd.f32 %v634, %v955
      %v957 = vpop.f32.mrb[0].mxu0
      %v958 = vpop.f32.mrb[0].mxu0
      %v959 = vadd.f32 %v634, %v958
      %v960 = vpop.f32.mrb[0].mxu0
      %961 = vmatprep.mubr.bf16.mxu0 0
      %962 = vmatmul.mubr.bf16.gmra.mrb[0].mxu0 %v719
      %v963 = vpop.f32.mrb[0].mxu0
      %v964 = vadd.f32 %v634, %v963
      %v965 = vpop.f32.mrb[0].mxu0
      %v966 = vpop.f32.mrb[0].mxu0
      %v967 = vadd.f32 %v634, %v966
      %v968 = vpop.f32.mrb[0].mxu0
      %969 = vmatprep.mubr.bf16.mxu0 0
      %970 = vmatmul.mubr.bf16.gmra.mrb[0].mxu0 %v722
      %v971 = vpop.f32.mrb[0].mxu0
      %v972 = vadd.f32 %v634, %v971
      %v973 = vpop.f32.mrb[0].mxu0
      %v974 = vpop.f32.mrb[0].mxu0
      %v975 = vadd.f32 %v634, %v974
      %v976 = vpop.f32.mrb[0].mxu0
      %977 = vmatprep.mubr.bf16.mxu0 0
      %978 = vmatmul.mubr.bf16.gmra.mrb[0].mxu0 %v725
      %v979 = vpop.f32.mrb[0].mxu0
      %v980 = vadd.f32 %v634, %v979
      %v981 = vpop.f32.mrb[0].mxu0
      %v982 = vpop.f32.mrb[0].mxu0
      %v983 = vadd.f32 %v634, %v982
      %v984 = vpop.f32.mrb[0].mxu0
      %985 = vmatprep.mubr.bf16.mxu0 0
      %986 = vmatmul.mubr.bf16.gmra.mrb[0].mxu0 %v728
      %v987 = vpop.f32.mrb[0].mxu0
      %v988 = vadd.f32 %v634, %v987
      %v989 = vpop.f32.mrb[0].mxu0
      %v990 = vpop.f32.mrb[0].mxu0
      %v991 = vadd.f32 %v634, %v990
      %v992 = vpop.f32.mrb[0].mxu0
      %993 = vmatprep.mubr.bf16.mxu0 0
      %994 = vmatmul.mubr.bf16.gmra.mrb[0].mxu0 %v731
      %v995 = vpop.f32.mrb[0].mxu0
      %v996 = vadd.f32 %v634, %v995
      %v997 = vpop.f32.mrb[0].mxu0
      %v998 = vpop.f32.mrb[0].mxu0
      %v999 = vadd.f32 %v634, %v998
      %v1000 = vpop.f32.mrb[0].mxu0
      %1001 = vmatprep.mubr.bf16.mxu0 0
      %1002 = vmatmul.mubr.bf16.gmra.mrb[0].mxu0 %v734
      %v1003 = vpop.f32.mrb[0].mxu0
      %v1004 = vadd.f32 %v634, %v1003
      %v1005 = vpop.f32.mrb[0].mxu0
      %v1006 = vpop.f32.mrb[0].mxu0
      %v1007 = vadd.f32 %v634, %v1006
      %v1008 = vpop.f32.mrb[0].mxu0
      %1009 = vmatprep.mubr.bf16.mxu0 0
      %1010 = vmatmul.mubr.bf16.gmra.mrb[0].mxu0 %v737
      %v1011 = vpop.f32.mrb[0].mxu0
      %v1012 = vadd.f32 %v634, %v1011
      %v1013 = vpop.f32.mrb[0].mxu0
      %v1014 = vpop.f32.mrb[0].mxu0
      %v1015 = vadd.f32 %v634, %v1014
      %v1016 = vpop.f32.mrb[0].mxu0
      %1017 = vmatprep.mubr.bf16.mxu0 0
      %1018 = vmatmul.mubr.bf16.gmra.mrb[0].mxu0 %v740
      %v1019 = vpop.f32.mrb[0].mxu0
      %v1020 = vadd.f32 %v634, %v1019
      %v1021 = vpop.f32.mrb[0].mxu0
      %v1022 = vpop.f32.mrb[0].mxu0
      %v1023 = vadd.f32 %v634, %v1022
      %v1024 = vpop.f32.mrb[0].mxu0
      %1025 = vmatprep.mubr.bf16.mxu0 0
      %1026 = vmatmul.mubr.bf16.gmra.mrb[0].mxu0 %v743
      %v1027 = vpop.f32.mrb[0].mxu0
      %v1028 = vadd.f32 %v634, %v1027
      %v1029 = vpop.f32.mrb[0].mxu0
      %v1030 = vpop.f32.mrb[0].mxu0
      %v1031 = vadd.f32 %v634, %v1030
      %v1032 = vpop.f32.mrb[0].mxu0
      %1033 = vdwg.mxu0
      %1034 = vmax.xlane.f32.xlu0 %v780
      %v1035 = vpop.xlane.xlu0 %1034
      %1036 = vmax.xlane.f32.xlu0 %v783
      %v1037 = vpop.xlane.xlu0 %1036
      %1038 = vmax.xlane.f32.xlu0 %v788
      %v1039 = vpop.xlane.xlu0 %1038
      %1040 = vmax.xlane.f32.xlu0 %v791
      %v1041 = vpop.xlane.xlu0 %1040
      %1042 = vmax.xlane.f32.xlu0 %v796
      %v1043 = vpop.xlane.xlu0 %1042
      %1044 = vmax.xlane.f32.xlu0 %v799
      %v1045 = vpop.xlane.xlu0 %1044
      %1046 = vmax.xlane.f32.xlu0 %v804
      %v1047 = vpop.xlane.xlu0 %1046
      %1048 = vmax.xlane.f32.xlu0 %v807
      %v1049 = vpop.xlane.xlu0 %1048
      %1050 = vmax.xlane.f32.xlu0 %v812
      %v1051 = vpop.xlane.xlu0 %1050
      %1052 = vmax.xlane.f32.xlu0 %v815
      %v1053 = vpop.xlane.xlu0 %1052
      %1054 = vmax.xlane.f32.xlu0 %v820
      %v1055 = vpop.xlane.xlu0 %1054
      %1056 = vmax.xlane.f32.xlu0 %v823
      %v1057 = vpop.xlane.xlu0 %1056
      %1058 = vmax.xlane.f32.xlu0 %v828
      %v1059 = vpop.xlane.xlu0 %1058
      %1060 = vmax.xlane.f32.xlu0 %v831
      %v1061 = vpop.xlane.xlu0 %1060
      %1062 = vmax.xlane.f32.xlu0 %v836
      %v1063 = vpop.xlane.xlu0 %1062
      %1064 = vmax.xlane.f32.xlu0 %v839
      %v1065 = vpop.xlane.xlu0 %1064
      %1066 = vmax.xlane.f32.xlu0 %v844
      %v1067 = vpop.xlane.xlu0 %1066
      %1068 = vmax.xlane.f32.xlu0 %v847
      %v1069 = vpop.xlane.xlu0 %1068
      %1070 = vmax.xlane.f32.xlu0 %v852
      %v1071 = vpop.xlane.xlu0 %1070
      %1072 = vmax.xlane.f32.xlu0 %v855
      %v1073 = vpop.xlane.xlu0 %1072
      %1074 = vmax.xlane.f32.xlu0 %v860
      %v1075 = vpop.xlane.xlu0 %1074
      %1076 = vmax.xlane.f32.xlu0 %v863
      %v1077 = vpop.xlane.xlu0 %1076
      %1078 = vmax.xlane.f32.xlu0 %v868
      %v1079 = vpop.xlane.xlu0 %1078
      %1080 = vmax.xlane.f32.xlu0 %v871
      %v1081 = vpop.xlane.xlu0 %1080
      %1082 = vmax.xlane.f32.xlu0 %v876
      %v1083 = vpop.xlane.xlu0 %1082
      %1084 = vmax.xlane.f32.xlu0 %v879
      %v1085 = vpop.xlane.xlu0 %1084
      %1086 = vmax.xlane.f32.xlu0 %v884
      %v1087 = vpop.xlane.xlu0 %1086
      %1088 = vmax.xlane.f32.xlu0 %v887
      %v1089 = vpop.xlane.xlu0 %1088
      %1090 = vmax.xlane.f32.xlu0 %v892
      %v1091 = vpop.xlane.xlu0 %1090
      %1092 = vmax.xlane.f32.xlu0 %v895
      %v1093 = vpop.xlane.xlu0 %1092
      %1094 = vmax.xlane.f32.xlu0 %v900
      %v1095 = vpop.xlane.xlu0 %1094
      %1096 = vmax.xlane.f32.xlu0 %v903
      %v1097 = vpop.xlane.xlu0 %1096
      %1098 = vmax.xlane.f32.xlu0 %v908
      %v1099 = vpop.xlane.xlu0 %1098
      %1100 = vmax.xlane.f32.xlu0 %v911
      %v1101 = vpop.xlane.xlu0 %1100
      %1102 = vmax.xlane.f32.xlu0 %v916
      %v1103 = vpop.xlane.xlu0 %1102
      %1104 = vmax.xlane.f32.xlu0 %v919
      %v1105 = vpop.xlane.xlu0 %1104
      %1106 = vmax.xlane.f32.xlu0 %v924
      %v1107 = vpop.xlane.xlu0 %1106
      %1108 = vmax.xlane.f32.xlu0 %v927
      %v1109 = vpop.xlane.xlu0 %1108
      %1110 = vmax.xlane.f32.xlu0 %v932
      %v1111 = vpop.xlane.xlu0 %1110
      %1112 = vmax.xlane.f32.xlu0 %v935
      %v1113 = vpop.xlane.xlu0 %1112
      %1114 = vmax.xlane.f32.xlu0 %v940
      %v1115 = vpop.xlane.xlu0 %1114
      %1116 = vmax.xlane.f32.xlu0 %v943
      %v1117 = vpop.xlane.xlu0 %1116
      %1118 = vmax.xlane.f32.xlu0 %v948
      %v1119 = vpop.xlane.xlu0 %1118
      %1120 = vmax.xlane.f32.xlu0 %v951
      %v1121 = vpop.xlane.xlu0 %1120
      %1122 = vmax.xlane.f32.xlu0 %v956
      %v1123 = vpop.xlane.xlu0 %1122
      %1124 = vmax.xlane.f32.xlu0 %v959
      %v1125 = vpop.xlane.xlu0 %1124
      %1126 = vmax.xlane.f32.xlu0 %v964
      %v1127 = vpop.xlane.xlu0 %1126
      %1128 = vmax.xlane.f32.xlu0 %v967
      %v1129 = vpop.xlane.xlu0 %1128
      %1130 = vmax.xlane.f32.xlu0 %v972
      %v1131 = vpop.xlane.xlu0 %1130
      %1132 = vmax.xlane.f32.xlu0 %v975
      %v1133 = vpop.xlane.xlu0 %1132
      %1134 = vmax.xlane.f32.xlu0 %v980
      %v1135 = vpop.xlane.xlu0 %1134
      %1136 = vmax.xlane.f32.xlu0 %v983
      %v1137 = vpop.xlane.xlu0 %1136
      %1138 = vmax.xlane.f32.xlu0 %v988
      %v1139 = vpop.xlane.xlu0 %1138
      %1140 = vmax.xlane.f32.xlu0 %v991
      %v1141 = vpop.xlane.xlu0 %1140
      %1142 = vmax.xlane.f32.xlu0 %v996
      %v1143 = vpop.xlane.xlu0 %1142
      %1144 = vmax.xlane.f32.xlu0 %v999
      %v1145 = vpop.xlane.xlu0 %1144
      %1146 = vmax.xlane.f32.xlu0 %v1004
      %v1147 = vpop.xlane.xlu0 %1146
      %1148 = vmax.xlane.f32.xlu0 %v1007
      %v1149 = vpop.xlane.xlu0 %1148
      %1150 = vmax.xlane.f32.xlu0 %v1012
      %v1151 = vpop.xlane.xlu0 %1150
      %1152 = vmax.xlane.f32.xlu0 %v1015
      %v1153 = vpop.xlane.xlu0 %1152
      %1154 = vmax.xlane.f32.xlu0 %v1020
      %v1155 = vpop.xlane.xlu0 %1154
      %1156 = vmax.xlane.f32.xlu0 %v1023
      %v1157 = vpop.xlane.xlu0 %1156
      %1158 = vmax.xlane.f32.xlu0 %v1028
      %v1159 = vpop.xlane.xlu0 %1158
      %1160 = vmax.xlane.f32.xlu0 %v1031
      %v1161 = vpop.xlane.xlu0 %1160
      %v1162 = vsub.f32 %v780, %v1035
      %v1163 = vsub.f32 %v783, %v1037
      %v1164 = vsub.f32 %v788, %v1039
      %v1165 = vsub.f32 %v791, %v1041
      %v1166 = vsub.f32 %v796, %v1043
      %v1167 = vsub.f32 %v799, %v1045
      %v1168 = vsub.f32 %v804, %v1047
      %v1169 = vsub.f32 %v807, %v1049
      %v1170 = vsub.f32 %v812, %v1051
      %v1171 = vsub.f32 %v815, %v1053
      %v1172 = vsub.f32 %v820, %v1055
      %v1173 = vsub.f32 %v823, %v1057
      %v1174 = vsub.f32 %v828, %v1059
      %v1175 = vsub.f32 %v831, %v1061
      %v1176 = vsub.f32 %v836, %v1063
      %v1177 = vsub.f32 %v839, %v1065
      %v1178 = vsub.f32 %v844, %v1067
      %v1179 = vsub.f32 %v847, %v1069
      %v1180 = vsub.f32 %v852, %v1071
      %v1181 = vsub.f32 %v855, %v1073
      %v1182 = vsub.f32 %v860, %v1075
      %v1183 = vsub.f32 %v863, %v1077
      %v1184 = vsub.f32 %v868, %v1079
      %v1185 = vsub.f32 %v871, %v1081
      %v1186 = vsub.f32 %v876, %v1083
      %v1187 = vsub.f32 %v879, %v1085
      %v1188 = vsub.f32 %v884, %v1087
      %v1189 = vsub.f32 %v887, %v1089
      %v1190 = vsub.f32 %v892, %v1091
      %v1191 = vsub.f32 %v895, %v1093
      %v1192 = vsub.f32 %v900, %v1095
      %v1193 = vsub.f32 %v903, %v1097
      %v1194 = vsub.f32 %v908, %v1099
      %v1195 = vsub.f32 %v911, %v1101
      %v1196 = vsub.f32 %v916, %v1103
      %v1197 = vsub.f32 %v919, %v1105
      %v1198 = vsub.f32 %v924, %v1107
      %v1199 = vsub.f32 %v927, %v1109
      %v1200 = vsub.f32 %v932, %v1111
      %v1201 = vsub.f32 %v935, %v1113
      %v1202 = vsub.f32 %v940, %v1115
      %v1203 = vsub.f32 %v943, %v1117
      %v1204 = vsub.f32 %v948, %v1119
      %v1205 = vsub.f32 %v951, %v1121
      %v1206 = vsub.f32 %v956, %v1123
      %v1207 = vsub.f32 %v959, %v1125
      %v1208 = vsub.f32 %v964, %v1127
      %v1209 = vsub.f32 %v967, %v1129
      %v1210 = vsub.f32 %v972, %v1131
      %v1211 = vsub.f32 %v975, %v1133
      %v1212 = vsub.f32 %v980, %v1135
      %v1213 = vsub.f32 %v983, %v1137
      %v1214 = vsub.f32 %v988, %v1139
      %v1215 = vsub.f32 %v991, %v1141
      %v1216 = vsub.f32 %v996, %v1143
      %v1217 = vsub.f32 %v999, %v1145
      %v1218 = vsub.f32 %v1004, %v1147
      %v1219 = vsub.f32 %v1007, %v1149
      %v1220 = vsub.f32 %v1012, %v1151
      %v1221 = vsub.f32 %v1015, %v1153
      %v1222 = vsub.f32 %v1020, %v1155
      %v1223 = vsub.f32 %v1023, %v1157
      %v1224 = vsub.f32 %v1028, %v1159
      %v1225 = vsub.f32 %v1031, %v1161
      %v1226 = vmul.f32 %v1162, 1.442695
      %v1227 = vpow.pop %v1226
      %v1228 = vmul.f32 %v1163, 1.442695
      %v1229 = vpow.pop %v1228
      %v1230 = vmul.f32 %v1164, 1.442695
      %v1231 = vpow.pop %v1230
      %v1232 = vmul.f32 %v1165, 1.442695
      %v1233 = vpow.pop %v1232
      %v1234 = vmul.f32 %v1166, 1.442695
      %v1235 = vpow.pop %v1234
      %v1236 = vmul.f32 %v1167, 1.442695
      %v1237 = vpow.pop %v1236
      %v1238 = vmul.f32 %v1168, 1.442695
      %v1239 = vpow.pop %v1238
      %v1240 = vmul.f32 %v1169, 1.442695
      %v1241 = vpow.pop %v1240
      %v1242 = vmul.f32 %v1170, 1.442695
      %v1243 = vpow.pop %v1242
      %v1244 = vmul.f32 %v1171, 1.442695
      %v1245 = vpow.pop %v1244
      %v1246 = vmul.f32 %v1172, 1.442695
      %v1247 = vpow.pop %v1246
      %v1248 = vmul.f32 %v1173, 1.442695
      %v1249 = vpow.pop %v1248
      %v1250 = vmul.f32 %v1174, 1.442695
      %v1251 = vpow.pop %v1250
      %v1252 = vmul.f32 %v1175, 1.442695
      %v1253 = vpow.pop %v1252
      %v1254 = vmul.f32 %v1176, 1.442695
      %v1255 = vpow.pop %v1254
      %v1256 = vmul.f32 %v1177, 1.442695
      %v1257 = vpow.pop %v1256
      %v1258 = vmul.f32 %v1178, 1.442695
      %v1259 = vpow.pop %v1258
      %v1260 = vmul.f32 %v1179, 1.442695
      %v1261 = vpow.pop %v1260
      %v1262 = vmul.f32 %v1180, 1.442695
      %v1263 = vpow.pop %v1262
      %v1264 = vmul.f32 %v1181, 1.442695
      %v1265 = vpow.pop %v1264
      %v1266 = vmul.f32 %v1182, 1.442695
      %v1267 = vpow.pop %v1266
      %v1268 = vmul.f32 %v1183, 1.442695
      %v1269 = vpow.pop %v1268
      %v1270 = vmul.f32 %v1184, 1.442695
      %v1271 = vpow.pop %v1270
      %v1272 = vmul.f32 %v1185, 1.442695
      %v1273 = vpow.pop %v1272
      %v1274 = vmul.f32 %v1186, 1.442695
      %v1275 = vpow.pop %v1274
      %v1276 = vmul.f32 %v1187, 1.442695
      %v1277 = vpow.pop %v1276
      %v1278 = vmul.f32 %v1188, 1.442695
      %v1279 = vpow.pop %v1278
      %v1280 = vmul.f32 %v1189, 1.442695
      %v1281 = vpow.pop %v1280
      %v1282 = vmul.f32 %v1190, 1.442695
      %v1283 = vpow.pop %v1282
      %v1284 = vmul.f32 %v1191, 1.442695
      %v1285 = vpow.pop %v1284
      %v1286 = vmul.f32 %v1192, 1.442695
      %v1287 = vpow.pop %v1286
      %v1288 = vmul.f32 %v1193, 1.442695
      %v1289 = vpow.pop %v1288
      %v1290 = vmul.f32 %v1194, 1.442695
      %v1291 = vpow.pop %v1290
      %v1292 = vmul.f32 %v1195, 1.442695
      %v1293 = vpow.pop %v1292
      %v1294 = vmul.f32 %v1196, 1.442695
      %v1295 = vpow.pop %v1294
      %v1296 = vmul.f32 %v1197, 1.442695
      %v1297 = vpow.pop %v1296
      %v1298 = vmul.f32 %v1198, 1.442695
      %v1299 = vpow.pop %v1298
      %v1300 = vmul.f32 %v1199, 1.442695
      %v1301 = vpow.pop %v1300
      %v1302 = vmul.f32 %v1200, 1.442695
      %v1303 = vpow.pop %v1302
      %v1304 = vmul.f32 %v1201, 1.442695
      %v1305 = vpow.pop %v1304
      %v1306 = vmul.f32 %v1202, 1.442695
      %v1307 = vpow.pop %v1306
      %v1308 = vmul.f32 %v1203, 1.442695
      %v1309 = vpow.pop %v1308
      %v1310 = vmul.f32 %v1204, 1.442695
      %v1311 = vpow.pop %v1310
      %v1312 = vmul.f32 %v1205, 1.442695
      %v1313 = vpow.pop %v1312
      %v1314 = vmul.f32 %v1206, 1.442695
      %v1315 = vpow.pop %v1314
      %v1316 = vmul.f32 %v1207, 1.442695
      %v1317 = vpow.pop %v1316
      %v1318 = vmul.f32 %v1208, 1.442695
      %v1319 = vpow.pop %v1318
      %v1320 = vmul.f32 %v1209, 1.442695
      %v1321 = vpow.pop %v1320
      %v1322 = vmul.f32 %v1210, 1.442695
      %v1323 = vpow.pop %v1322
      %v1324 = vmul.f32 %v1211, 1.442695
      %v1325 = vpow.pop %v1324
      %v1326 = vmul.f32 %v1212, 1.442695
      %v1327 = vpow.pop %v1326
      %v1328 = vmul.f32 %v1213, 1.442695
      %v1329 = vpow.pop %v1328
      %v1330 = vmul.f32 %v1214, 1.442695
      %v1331 = vpow.pop %v1330
      %v1332 = vmul.f32 %v1215, 1.442695
      %v1333 = vpow.pop %v1332
      %v1334 = vmul.f32 %v1216, 1.442695
      %v1335 = vpow.pop %v1334
      %v1336 = vmul.f32 %v1217, 1.442695
      %v1337 = vpow.pop %v1336
      %v1338 = vmul.f32 %v1218, 1.442695
      %v1339 = vpow.pop %v1338
      %v1340 = vmul.f32 %v1219, 1.442695
      %v1341 = vpow.pop %v1340
      %v1342 = vmul.f32 %v1220, 1.442695
      %v1343 = vpow.pop %v1342
      %v1344 = vmul.f32 %v1221, 1.442695
      %v1345 = vpow.pop %v1344
      %v1346 = vmul.f32 %v1222, 1.442695
      %v1347 = vpow.pop %v1346
      %v1348 = vmul.f32 %v1223, 1.442695
      %v1349 = vpow.pop %v1348
      %v1350 = vmul.f32 %v1224, 1.442695
      %v1351 = vpow.pop %v1350
      %v1352 = vmul.f32 %v1225, 1.442695
      %v1353 = vpow.pop %v1352
      %1354 = vadd.xlane.f32.xlu0 %v1227
      %v1355 = vpop.xlane.xlu0 %1354
      %1356 = vadd.xlane.f32.xlu0 %v1229
      %v1357 = vpop.xlane.xlu0 %1356
      %1358 = vadd.xlane.f32.xlu0 %v1231
      %v1359 = vpop.xlane.xlu0 %1358
      %1360 = vadd.xlane.f32.xlu0 %v1233
      %v1361 = vpop.xlane.xlu0 %1360
      %1362 = vadd.xlane.f32.xlu0 %v1235
      %v1363 = vpop.xlane.xlu0 %1362
      %1364 = vadd.xlane.f32.xlu0 %v1237
      %v1365 = vpop.xlane.xlu0 %1364
      %1366 = vadd.xlane.f32.xlu0 %v1239
      %v1367 = vpop.xlane.xlu0 %1366
      %1368 = vadd.xlane.f32.xlu0 %v1241
      %v1369 = vpop.xlane.xlu0 %1368
      %1370 = vadd.xlane.f32.xlu0 %v1243
      %v1371 = vpop.xlane.xlu0 %1370
      %1372 = vadd.xlane.f32.xlu0 %v1245
      %v1373 = vpop.xlane.xlu0 %1372
      %1374 = vadd.xlane.f32.xlu0 %v1247
      %v1375 = vpop.xlane.xlu0 %1374
      %1376 = vadd.xlane.f32.xlu0 %v1249
      %v1377 = vpop.xlane.xlu0 %1376
      %1378 = vadd.xlane.f32.xlu0 %v1251
      %v1379 = vpop.xlane.xlu0 %1378
      %1380 = vadd.xlane.f32.xlu0 %v1253
      %v1381 = vpop.xlane.xlu0 %1380
      %1382 = vadd.xlane.f32.xlu0 %v1255
      %v1383 = vpop.xlane.xlu0 %1382
      %1384 = vadd.xlane.f32.xlu0 %v1257
      %v1385 = vpop.xlane.xlu0 %1384
      %1386 = vadd.xlane.f32.xlu0 %v1259
      %v1387 = vpop.xlane.xlu0 %1386
      %1388 = vadd.xlane.f32.xlu0 %v1261
      %v1389 = vpop.xlane.xlu0 %1388
      %1390 = vadd.xlane.f32.xlu0 %v1263
      %v1391 = vpop.xlane.xlu0 %1390
      %1392 = vadd.xlane.f32.xlu0 %v1265
      %v1393 = vpop.xlane.xlu0 %1392
      %1394 = vadd.xlane.f32.xlu0 %v1267
      %v1395 = vpop.xlane.xlu0 %1394
      %1396 = vadd.xlane.f32.xlu0 %v1269
      %v1397 = vpop.xlane.xlu0 %1396
      %1398 = vadd.xlane.f32.xlu0 %v1271
      %v1399 = vpop.xlane.xlu0 %1398
      %1400 = vadd.xlane.f32.xlu0 %v1273
      %v1401 = vpop.xlane.xlu0 %1400
      %1402 = vadd.xlane.f32.xlu0 %v1275
      %v1403 = vpop.xlane.xlu0 %1402
      %1404 = vadd.xlane.f32.xlu0 %v1277
      %v1405 = vpop.xlane.xlu0 %1404
      %1406 = vadd.xlane.f32.xlu0 %v1279
      %v1407 = vpop.xlane.xlu0 %1406
      %1408 = vadd.xlane.f32.xlu0 %v1281
      %v1409 = vpop.xlane.xlu0 %1408
      %1410 = vadd.xlane.f32.xlu0 %v1283
      %v1411 = vpop.xlane.xlu0 %1410
      %1412 = vadd.xlane.f32.xlu0 %v1285
      %v1413 = vpop.xlane.xlu0 %1412
      %1414 = vadd.xlane.f32.xlu0 %v1287
      %v1415 = vpop.xlane.xlu0 %1414
      %1416 = vadd.xlane.f32.xlu0 %v1289
      %v1417 = vpop.xlane.xlu0 %1416
      %1418 = vadd.xlane.f32.xlu0 %v1291
      %v1419 = vpop.xlane.xlu0 %1418
      %1420 = vadd.xlane.f32.xlu0 %v1293
      %v1421 = vpop.xlane.xlu0 %1420
      %1422 = vadd.xlane.f32.xlu0 %v1295
      %v1423 = vpop.xlane.xlu0 %1422
      %1424 = vadd.xlane.f32.xlu0 %v1297
      %v1425 = vpop.xlane.xlu0 %1424
      %1426 = vadd.xlane.f32.xlu0 %v1299
      %v1427 = vpop.xlane.xlu0 %1426
      %1428 = vadd.xlane.f32.xlu0 %v1301
      %v1429 = vpop.xlane.xlu0 %1428
      %1430 = vadd.xlane.f32.xlu0 %v1303
      %v1431 = vpop.xlane.xlu0 %1430
      %1432 = vadd.xlane.f32.xlu0 %v1305
      %v1433 = vpop.xlane.xlu0 %1432
      %1434 = vadd.xlane.f32.xlu0 %v1307
      %v1435 = vpop.xlane.xlu0 %1434
      %1436 = vadd.xlane.f32.xlu0 %v1309
      %v1437 = vpop.xlane.xlu0 %1436
      %1438 = vadd.xlane.f32.xlu0 %v1311
      %v1439 = vpop.xlane.xlu0 %1438
      %1440 = vadd.xlane.f32.xlu0 %v1313
      %v1441 = vpop.xlane.xlu0 %1440
      %1442 = vadd.xlane.f32.xlu0 %v1315
      %v1443 = vpop.xlane.xlu0 %1442
      %1444 = vadd.xlane.f32.xlu0 %v1317
      %v1445 = vpop.xlane.xlu0 %1444
      %1446 = vadd.xlane.f32.xlu0 %v1319
      %v1447 = vpop.xlane.xlu0 %1446
      %1448 = vadd.xlane.f32.xlu0 %v1321
      %v1449 = vpop.xlane.xlu0 %1448
      %1450 = vadd.xlane.f32.xlu0 %v1323
      %v1451 = vpop.xlane.xlu0 %1450
      %1452 = vadd.xlane.f32.xlu0 %v1325
      %v1453 = vpop.xlane.xlu0 %1452
      %1454 = vadd.xlane.f32.xlu0 %v1327
      %v1455 = vpop.xlane.xlu0 %1454
      %1456 = vadd.xlane.f32.xlu0 %v1329
      %v1457 = vpop.xlane.xlu0 %1456
      %1458 = vadd.xlane.f32.xlu0 %v1331
      %v1459 = vpop.xlane.xlu0 %1458
      %1460 = vadd.xlane.f32.xlu0 %v1333
      %v1461 = vpop.xlane.xlu0 %1460
      %1462 = vadd.xlane.f32.xlu0 %v1335
      %v1463 = vpop.xlane.xlu0 %1462
      %1464 = vadd.xlane.f32.xlu0 %v1337
      %v1465 = vpop.xlane.xlu0 %1464
      %1466 = vadd.xlane.f32.xlu0 %v1339
      %v1467 = vpop.xlane.xlu0 %1466
      %1468 = vadd.xlane.f32.xlu0 %v1341
      %v1469 = vpop.xlane.xlu0 %1468
      %1470 = vadd.xlane.f32.xlu0 %v1343
      %v1471 = vpop.xlane.xlu0 %1470
      %1472 = vadd.xlane.f32.xlu0 %v1345
      %v1473 = vpop.xlane.xlu0 %1472
      %1474 = vadd.xlane.f32.xlu0 %v1347
      %v1475 = vpop.xlane.xlu0 %1474
      %1476 = vadd.xlane.f32.xlu0 %v1349
      %v1477 = vpop.xlane.xlu0 %1476
      %1478 = vadd.xlane.f32.xlu0 %v1351
      %v1479 = vpop.xlane.xlu0 %1478
      %1480 = vadd.xlane.f32.xlu0 %v1353
      %v1481 = vpop.xlane.xlu0 %1480
      %v1482 = vlog2.pop %v1355
      %v1483 = vmul.f32 %v1482, 0.6931472
      %v1484 = vlog2.pop %v1357
      %v1485 = vmul.f32 %v1484, 0.6931472
      %v1486 = vlog2.pop %v1359
      %v1487 = vmul.f32 %v1486, 0.6931472
      %v1488 = vlog2.pop %v1361
      %v1489 = vmul.f32 %v1488, 0.6931472
      %v1490 = vlog2.pop %v1363
      %v1491 = vmul.f32 %v1490, 0.6931472
      %v1492 = vlog2.pop %v1365
      %v1493 = vmul.f32 %v1492, 0.6931472
      %v1494 = vlog2.pop %v1367
      %v1495 = vmul.f32 %v1494, 0.6931472
      %v1496 = vlog2.pop %v1369
      %v1497 = vmul.f32 %v1496, 0.6931472
      %v1498 = vlog2.pop %v1371
      %v1499 = vmul.f32 %v1498, 0.6931472
      %v1500 = vlog2.pop %v1373
      %v1501 = vmul.f32 %v1500, 0.6931472
      %v1502 = vlog2.pop %v1375
      %v1503 = vmul.f32 %v1502, 0.6931472
      %v1504 = vlog2.pop %v1377
      %v1505 = vmul.f32 %v1504, 0.6931472
      %v1506 = vlog2.pop %v1379
      %v1507 = vmul.f32 %v1506, 0.6931472
      %v1508 = vlog2.pop %v1381
      %v1509 = vmul.f32 %v1508, 0.6931472
      %v1510 = vlog2.pop %v1383
      %v1511 = vmul.f32 %v1510, 0.6931472
      %v1512 = vlog2.pop %v1385
      %v1513 = vmul.f32 %v1512, 0.6931472
      %v1514 = vlog2.pop %v1387
      %v1515 = vmul.f32 %v1514, 0.6931472
      %v1516 = vlog2.pop %v1389
      %v1517 = vmul.f32 %v1516, 0.6931472
      %v1518 = vlog2.pop %v1391
      %v1519 = vmul.f32 %v1518, 0.6931472
      %v1520 = vlog2.pop %v1393
      %v1521 = vmul.f32 %v1520, 0.6931472
      %v1522 = vlog2.pop %v1395
      %v1523 = vmul.f32 %v1522, 0.6931472
      %v1524 = vlog2.pop %v1397
      %v1525 = vmul.f32 %v1524, 0.6931472
      %v1526 = vlog2.pop %v1399
      %v1527 = vmul.f32 %v1526, 0.6931472
      %v1528 = vlog2.pop %v1401
      %v1529 = vmul.f32 %v1528, 0.6931472
      %v1530 = vlog2.pop %v1403
      %v1531 = vmul.f32 %v1530, 0.6931472
      %v1532 = vlog2.pop %v1405
      %v1533 = vmul.f32 %v1532, 0.6931472
      %v1534 = vlog2.pop %v1407
      %v1535 = vmul.f32 %v1534, 0.6931472
      %v1536 = vlog2.pop %v1409
      %v1537 = vmul.f32 %v1536, 0.6931472
      %v1538 = vlog2.pop %v1411
      %v1539 = vmul.f32 %v1538, 0.6931472
      %v1540 = vlog2.pop %v1413
      %v1541 = vmul.f32 %v1540, 0.6931472
      %v1542 = vlog2.pop %v1415
      %v1543 = vmul.f32 %v1542, 0.6931472
      %v1544 = vlog2.pop %v1417
      %v1545 = vmul.f32 %v1544, 0.6931472
      %v1546 = vlog2.pop %v1419
      %v1547 = vmul.f32 %v1546, 0.6931472
      %v1548 = vlog2.pop %v1421
      %v1549 = vmul.f32 %v1548, 0.6931472
      %v1550 = vlog2.pop %v1423
      %v1551 = vmul.f32 %v1550, 0.6931472
      %v1552 = vlog2.pop %v1425
      %v1553 = vmul.f32 %v1552, 0.6931472
      %v1554 = vlog2.pop %v1427
      %v1555 = vmul.f32 %v1554, 0.6931472
      %v1556 = vlog2.pop %v1429
      %v1557 = vmul.f32 %v1556, 0.6931472
      %v1558 = vlog2.pop %v1431
      %v1559 = vmul.f32 %v1558, 0.6931472
      %v1560 = vlog2.pop %v1433
      %v1561 = vmul.f32 %v1560, 0.6931472
      %v1562 = vlog2.pop %v1435
      %v1563 = vmul.f32 %v1562, 0.6931472
      %v1564 = vlog2.pop %v1437
      %v1565 = vmul.f32 %v1564, 0.6931472
      %v1566 = vlog2.pop %v1439
      %v1567 = vmul.f32 %v1566, 0.6931472
      %v1568 = vlog2.pop %v1441
      %v1569 = vmul.f32 %v1568, 0.6931472
      %v1570 = vlog2.pop %v1443
      %v1571 = vmul.f32 %v1570, 0.6931472
      %v1572 = vlog2.pop %v1445
      %v1573 = vmul.f32 %v1572, 0.6931472
      %v1574 = vlog2.pop %v1447
      %v1575 = vmul.f32 %v1574, 0.6931472
      %v1576 = vlog2.pop %v1449
      %v1577 = vmul.f32 %v1576, 0.6931472
      %v1578 = vlog2.pop %v1451
      %v1579 = vmul.f32 %v1578, 0.6931472
      %v1580 = vlog2.pop %v1453
      %v1581 = vmul.f32 %v1580, 0.6931472
      %v1582 = vlog2.pop %v1455
      %v1583 = vmul.f32 %v1582, 0.6931472
      %v1584 = vlog2.pop %v1457
      %v1585 = vmul.f32 %v1584, 0.6931472
      %v1586 = vlog2.pop %v1459
      %v1587 = vmul.f32 %v1586, 0.6931472
      %v1588 = vlog2.pop %v1461
      %v1589 = vmul.f32 %v1588, 0.6931472
      %v1590 = vlog2.pop %v1463
      %v1591 = vmul.f32 %v1590, 0.6931472
      %v1592 = vlog2.pop %v1465
      %v1593 = vmul.f32 %v1592, 0.6931472
      %v1594 = vlog2.pop %v1467
      %v1595 = vmul.f32 %v1594, 0.6931472
      %v1596 = vlog2.pop %v1469
      %v1597 = vmul.f32 %v1596, 0.6931472
      %v1598 = vlog2.pop %v1471
      %v1599 = vmul.f32 %v1598, 0.6931472
      %v1600 = vlog2.pop %v1473
      %v1601 = vmul.f32 %v1600, 0.6931472
      %v1602 = vlog2.pop %v1475
      %v1603 = vmul.f32 %v1602, 0.6931472
      %v1604 = vlog2.pop %v1477
      %v1605 = vmul.f32 %v1604, 0.6931472
      %v1606 = vlog2.pop %v1479
      %v1607 = vmul.f32 %v1606, 0.6931472
      %v1608 = vlog2.pop %v1481
      %v1609 = vmul.f32 %v1608, 0.6931472
      %v1610 = vadd.f32 %v1035, %v1483
      %v1611 = vadd.f32 %v1037, %v1485
      %v1612 = vadd.f32 %v1039, %v1487
      %v1613 = vadd.f32 %v1041, %v1489
      %v1614 = vadd.f32 %v1043, %v1491
      %v1615 = vadd.f32 %v1045, %v1493
      %v1616 = vadd.f32 %v1047, %v1495
      %v1617 = vadd.f32 %v1049, %v1497
      %v1618 = vadd.f32 %v1051, %v1499
      %v1619 = vadd.f32 %v1053, %v1501
      %v1620 = vadd.f32 %v1055, %v1503
      %v1621 = vadd.f32 %v1057, %v1505
      %v1622 = vadd.f32 %v1059, %v1507
      %v1623 = vadd.f32 %v1061, %v1509
      %v1624 = vadd.f32 %v1063, %v1511
      %v1625 = vadd.f32 %v1065, %v1513
      %v1626 = vadd.f32 %v1067, %v1515
      %v1627 = vadd.f32 %v1069, %v1517
      %v1628 = vadd.f32 %v1071, %v1519
      %v1629 = vadd.f32 %v1073, %v1521
      %v1630 = vadd.f32 %v1075, %v1523
      %v1631 = vadd.f32 %v1077, %v1525
      %v1632 = vadd.f32 %v1079, %v1527
      %v1633 = vadd.f32 %v1081, %v1529
      %v1634 = vadd.f32 %v1083, %v1531
      %v1635 = vadd.f32 %v1085, %v1533
      %v1636 = vadd.f32 %v1087, %v1535
      %v1637 = vadd.f32 %v1089, %v1537
      %v1638 = vadd.f32 %v1091, %v1539
      %v1639 = vadd.f32 %v1093, %v1541
      %v1640 = vadd.f32 %v1095, %v1543
      %v1641 = vadd.f32 %v1097, %v1545
      %v1642 = vadd.f32 %v1099, %v1547
      %v1643 = vadd.f32 %v1101, %v1549
      %v1644 = vadd.f32 %v1103, %v1551
      %v1645 = vadd.f32 %v1105, %v1553
      %v1646 = vadd.f32 %v1107, %v1555
      %v1647 = vadd.f32 %v1109, %v1557
      %v1648 = vadd.f32 %v1111, %v1559
      %v1649 = vadd.f32 %v1113, %v1561
      %v1650 = vadd.f32 %v1115, %v1563
      %v1651 = vadd.f32 %v1117, %v1565
      %v1652 = vadd.f32 %v1119, %v1567
      %v1653 = vadd.f32 %v1121, %v1569
      %v1654 = vadd.f32 %v1123, %v1571
      %v1655 = vadd.f32 %v1125, %v1573
      %v1656 = vadd.f32 %v1127, %v1575
      %v1657 = vadd.f32 %v1129, %v1577
      %v1658 = vadd.f32 %v1131, %v1579
      %v1659 = vadd.f32 %v1133, %v1581
      %v1660 = vadd.f32 %v1135, %v1583
      %v1661 = vadd.f32 %v1137, %v1585
      %v1662 = vadd.f32 %v1139, %v1587
      %v1663 = vadd.f32 %v1141, %v1589
      %v1664 = vadd.f32 %v1143, %v1591
      %v1665 = vadd.f32 %v1145, %v1593
      %v1666 = vadd.f32 %v1147, %v1595
      %v1667 = vadd.f32 %v1149, %v1597
      %v1668 = vadd.f32 %v1151, %v1599
      %v1669 = vadd.f32 %v1153, %v1601
      %v1670 = vadd.f32 %v1155, %v1603
      %v1671 = vadd.f32 %v1157, %v1605
      %v1672 = vadd.f32 %v1159, %v1607
      %v1673 = vadd.f32 %v1161, %v1609
      %v1674 = vld [vmem:[%s291] sm:$0xff]
      %v1675 = vld [vmem:[%s291 + $0x8] sm:$0xff]
      %v1676 = vld [vmem:[%s291 + $0x10] sm:$0xff]
      %v1677 = vld [vmem:[%s291 + $0x18] sm:$0xff]
      %v1678 = vld [vmem:[%s291 + $0x20] sm:$0xff]
      %v1679 = vld [vmem:[%s291 + $0x28] sm:$0xff]
      %v1680 = vld [vmem:[%s291 + $0x30] sm:$0xff]
      %v1681 = vld [vmem:[%s291 + $0x38] sm:$0xff]
      %v1682 = vld [vmem:[%s291 + $0x40] sm:$0xff]
      %v1683 = vld [vmem:[%s291 + $0x48] sm:$0xff]
      %v1684 = vld [vmem:[%s291 + $0x50] sm:$0xff]
      %v1685 = vld [vmem:[%s291 + $0x58] sm:$0xff]
      %v1686 = vld [vmem:[%s291 + $0x60] sm:$0xff]
      %v1687 = vld [vmem:[%s291 + $0x68] sm:$0xff]
      %v1688 = vld [vmem:[%s291 + $0x70] sm:$0xff]
      %v1689 = vld [vmem:[%s291 + $0x78] sm:$0xff]
      %v1690 = vld [vmem:[%s291 + $0x80] sm:$0xff]
      %v1691 = vld [vmem:[%s291 + $0x88] sm:$0xff]
      %v1692 = vld [vmem:[%s291 + $0x90] sm:$0xff]
      %v1693 = vld [vmem:[%s291 + $0x98] sm:$0xff]
      %v1694 = vld [vmem:[%s291 + $0xa0] sm:$0xff]
      %v1695 = vld [vmem:[%s291 + $0xa8] sm:$0xff]
      %v1696 = vld [vmem:[%s291 + $0xb0] sm:$0xff]
      %v1697 = vld [vmem:[%s291 + $0xb8] sm:$0xff]
      %v1698 = vld [vmem:[%s291 + $0xc0] sm:$0xff]
      %v1699 = vld [vmem:[%s291 + $0xc8] sm:$0xff]
      %v1700 = vld [vmem:[%s291 + $0xd0] sm:$0xff]
      %v1701 = vld [vmem:[%s291 + $0xd8] sm:$0xff]
      %v1702 = vld [vmem:[%s291 + $0xe0] sm:$0xff]
      %v1703 = vld [vmem:[%s291 + $0xe8] sm:$0xff]
      %v1704 = vld [vmem:[%s291 + $0xf0] sm:$0xff]
      %v1705 = vld [vmem:[%s291 + $0xf8] sm:$0xff]
      %v1706 = vld [vmem:[%s291 + $0x100] sm:$0xff]
      %v1707 = vld [vmem:[%s291 + $0x108] sm:$0xff]
      %v1708 = vld [vmem:[%s291 + $0x110] sm:$0xff]
      %v1709 = vld [vmem:[%s291 + $0x118] sm:$0xff]
      %v1710 = vld [vmem:[%s291 + $0x120] sm:$0xff]
      %v1711 = vld [vmem:[%s291 + $0x128] sm:$0xff]
      %v1712 = vld [vmem:[%s291 + $0x130] sm:$0xff]
      %v1713 = vld [vmem:[%s291 + $0x138] sm:$0xff]
      %v1714 = vld [vmem:[%s291 + $0x140] sm:$0xff]
      %v1715 = vld [vmem:[%s291 + $0x148] sm:$0xff]
      %v1716 = vld [vmem:[%s291 + $0x150] sm:$0xff]
      %v1717 = vld [vmem:[%s291 + $0x158] sm:$0xff]
      %v1718 = vld [vmem:[%s291 + $0x160] sm:$0xff]
      %v1719 = vld [vmem:[%s291 + $0x168] sm:$0xff]
      %v1720 = vld [vmem:[%s291 + $0x170] sm:$0xff]
      %v1721 = vld [vmem:[%s291 + $0x178] sm:$0xff]
      %v1722 = vld [vmem:[%s291 + $0x180] sm:$0xff]
      %v1723 = vld [vmem:[%s291 + $0x188] sm:$0xff]
      %v1724 = vld [vmem:[%s291 + $0x190] sm:$0xff]
      %v1725 = vld [vmem:[%s291 + $0x198] sm:$0xff]
      %v1726 = vld [vmem:[%s291 + $0x1a0] sm:$0xff]
      %v1727 = vld [vmem:[%s291 + $0x1a8] sm:$0xff]
      %v1728 = vld [vmem:[%s291 + $0x1b0] sm:$0xff]
      %v1729 = vld [vmem:[%s291 + $0x1b8] sm:$0xff]
      %v1730 = vld [vmem:[%s291 + $0x1c0] sm:$0xff]
      %v1731 = vld [vmem:[%s291 + $0x1c8] sm:$0xff]
      %v1732 = vld [vmem:[%s291 + $0x1d0] sm:$0xff]
      %v1733 = vld [vmem:[%s291 + $0x1d8] sm:$0xff]
      %v1734 = vld [vmem:[%s291 + $0x1e0] sm:$0xff]
      %v1735 = vld [vmem:[%s291 + $0x1e8] sm:$0xff]
      %v1736 = vld [vmem:[%s291 + $0x1f0] sm:$0xff]
      %v1737 = vld [vmem:[%s291 + $0x1f8] sm:$0xff]
      %v1738 = vlaneseq
      %v1739 = vand.u32 %v1738, 127
      %1740 = vset.pattern.permute.xlu0 0
      %1741 = vperm.xlu0 %1740, %v1674
      %v1742 = vpop.permute.xlu0 %1741
      %1743 = vset.pattern.permute.xlu0 0
      %1744 = vperm.xlu0 %1743, %v1675
      %v1745 = vpop.permute.xlu0 %1744
      %1746 = vset.pattern.permute.xlu0 0
      %1747 = vperm.xlu0 %1746, %v1676
      %v1748 = vpop.permute.xlu0 %1747
      %1749 = vset.pattern.permute.xlu0 0
      %1750 = vperm.xlu0 %1749, %v1677
      %v1751 = vpop.permute.xlu0 %1750
      %1752 = vset.pattern.permute.xlu0 0
      %1753 = vperm.xlu0 %1752, %v1678
      %v1754 = vpop.permute.xlu0 %1753
      %1755 = vset.pattern.permute.xlu0 0
      %1756 = vperm.xlu0 %1755, %v1679
      %v1757 = vpop.permute.xlu0 %1756
      %1758 = vset.pattern.permute.xlu0 0
      %1759 = vperm.xlu0 %1758, %v1680
      %v1760 = vpop.permute.xlu0 %1759
      %1761 = vset.pattern.permute.xlu0 0
      %1762 = vperm.xlu0 %1761, %v1681
      %v1763 = vpop.permute.xlu0 %1762
      %1764 = vset.pattern.permute.xlu0 0
      %1765 = vperm.xlu0 %1764, %v1682
      %v1766 = vpop.permute.xlu0 %1765
      %1767 = vset.pattern.permute.xlu0 0
      %1768 = vperm.xlu0 %1767, %v1683
      %v1769 = vpop.permute.xlu0 %1768
      %1770 = vset.pattern.permute.xlu0 0
      %1771 = vperm.xlu0 %1770, %v1684
      %v1772 = vpop.permute.xlu0 %1771
      %1773 = vset.pattern.permute.xlu0 0
      %1774 = vperm.xlu0 %1773, %v1685
      %v1775 = vpop.permute.xlu0 %1774
      %1776 = vset.pattern.permute.xlu0 0
      %1777 = vperm.xlu0 %1776, %v1686
      %v1778 = vpop.permute.xlu0 %1777
      %1779 = vset.pattern.permute.xlu0 0
      %1780 = vperm.xlu0 %1779, %v1687
      %v1781 = vpop.permute.xlu0 %1780
      %1782 = vset.pattern.permute.xlu0 0
      %1783 = vperm.xlu0 %1782, %v1688
      %v1784 = vpop.permute.xlu0 %1783
      %1785 = vset.pattern.permute.xlu0 0
      %1786 = vperm.xlu0 %1785, %v1689
      %v1787 = vpop.permute.xlu0 %1786
      %1788 = vset.pattern.permute.xlu0 0
      %1789 = vperm.xlu0 %1788, %v1690
      %v1790 = vpop.permute.xlu0 %1789
      %1791 = vset.pattern.permute.xlu0 0
      %1792 = vperm.xlu0 %1791, %v1691
      %v1793 = vpop.permute.xlu0 %1792
      %1794 = vset.pattern.permute.xlu0 0
      %1795 = vperm.xlu0 %1794, %v1692
      %v1796 = vpop.permute.xlu0 %1795
      %1797 = vset.pattern.permute.xlu0 0
      %1798 = vperm.xlu0 %1797, %v1693
      %v1799 = vpop.permute.xlu0 %1798
      %1800 = vset.pattern.permute.xlu0 0
      %1801 = vperm.xlu0 %1800, %v1694
      %v1802 = vpop.permute.xlu0 %1801
      %1803 = vset.pattern.permute.xlu0 0
      %1804 = vperm.xlu0 %1803, %v1695
      %v1805 = vpop.permute.xlu0 %1804
      %1806 = vset.pattern.permute.xlu0 0
      %1807 = vperm.xlu0 %1806, %v1696
      %v1808 = vpop.permute.xlu0 %1807
      %1809 = vset.pattern.permute.xlu0 0
      %1810 = vperm.xlu0 %1809, %v1697
      %v1811 = vpop.permute.xlu0 %1810
      %1812 = vset.pattern.permute.xlu0 0
      %1813 = vperm.xlu0 %1812, %v1698
      %v1814 = vpop.permute.xlu0 %1813
      %1815 = vset.pattern.permute.xlu0 0
      %1816 = vperm.xlu0 %1815, %v1699
      %v1817 = vpop.permute.xlu0 %1816
      %1818 = vset.pattern.permute.xlu0 0
      %1819 = vperm.xlu0 %1818, %v1700
      %v1820 = vpop.permute.xlu0 %1819
      %1821 = vset.pattern.permute.xlu0 0
      %1822 = vperm.xlu0 %1821, %v1701
      %v1823 = vpop.permute.xlu0 %1822
      %1824 = vset.pattern.permute.xlu0 0
      %1825 = vperm.xlu0 %1824, %v1702
      %v1826 = vpop.permute.xlu0 %1825
      %1827 = vset.pattern.permute.xlu0 0
      %1828 = vperm.xlu0 %1827, %v1703
      %v1829 = vpop.permute.xlu0 %1828
      %1830 = vset.pattern.permute.xlu0 0
      %1831 = vperm.xlu0 %1830, %v1704
      %v1832 = vpop.permute.xlu0 %1831
      %1833 = vset.pattern.permute.xlu0 0
      %1834 = vperm.xlu0 %1833, %v1705
      %v1835 = vpop.permute.xlu0 %1834
      %1836 = vset.pattern.permute.xlu0 0
      %1837 = vperm.xlu0 %1836, %v1706
      %v1838 = vpop.permute.xlu0 %1837
      %1839 = vset.pattern.permute.xlu0 0
      %1840 = vperm.xlu0 %1839, %v1707
      %v1841 = vpop.permute.xlu0 %1840
      %1842 = vset.pattern.permute.xlu0 0
      %1843 = vperm.xlu0 %1842, %v1708
      %v1844 = vpop.permute.xlu0 %1843
      %1845 = vset.pattern.permute.xlu0 0
      %1846 = vperm.xlu0 %1845, %v1709
      %v1847 = vpop.permute.xlu0 %1846
      %1848 = vset.pattern.permute.xlu0 0
      %1849 = vperm.xlu0 %1848, %v1710
      %v1850 = vpop.permute.xlu0 %1849
      %1851 = vset.pattern.permute.xlu0 0
      %1852 = vperm.xlu0 %1851, %v1711
      %v1853 = vpop.permute.xlu0 %1852
      %1854 = vset.pattern.permute.xlu0 0
      %1855 = vperm.xlu0 %1854, %v1712
      %v1856 = vpop.permute.xlu0 %1855
      %1857 = vset.pattern.permute.xlu0 0
      %1858 = vperm.xlu0 %1857, %v1713
      %v1859 = vpop.permute.xlu0 %1858
      %1860 = vset.pattern.permute.xlu0 0
      %1861 = vperm.xlu0 %1860, %v1714
      %v1862 = vpop.permute.xlu0 %1861
      %1863 = vset.pattern.permute.xlu0 0
      %1864 = vperm.xlu0 %1863, %v1715
      %v1865 = vpop.permute.xlu0 %1864
      %1866 = vset.pattern.permute.xlu0 0
      %1867 = vperm.xlu0 %1866, %v1716
      %v1868 = vpop.permute.xlu0 %1867
      %1869 = vset.pattern.permute.xlu0 0
      %1870 = vperm.xlu0 %1869, %v1717
      %v1871 = vpop.permute.xlu0 %1870
      %1872 = vset.pattern.permute.xlu0 0
      %1873 = vperm.xlu0 %1872, %v1718
      %v1874 = vpop.permute.xlu0 %1873
      %1875 = vset.pattern.permute.xlu0 0
      %1876 = vperm.xlu0 %1875, %v1719
      %v1877 = vpop.permute.xlu0 %1876
      %1878 = vset.pattern.permute.xlu0 0
      %1879 = vperm.xlu0 %1878, %v1720
      %v1880 = vpop.permute.xlu0 %1879
      %1881 = vset.pattern.permute.xlu0 0
      %1882 = vperm.xlu0 %1881, %v1721
      %v1883 = vpop.permute.xlu0 %1882
      %1884 = vset.pattern.permute.xlu0 0
      %1885 = vperm.xlu0 %1884, %v1722
      %v1886 = vpop.permute.xlu0 %1885
      %1887 = vset.pattern.permute.xlu0 0
      %1888 = vperm.xlu0 %1887, %v1723
      %v1889 = vpop.permute.xlu0 %1888
      %1890 = vset.pattern.permute.xlu0 0
      %1891 = vperm.xlu0 %1890, %v1724
      %v1892 = vpop.permute.xlu0 %1891
      %1893 = vset.pattern.permute.xlu0 0
      %1894 = vperm.xlu0 %1893, %v1725
      %v1895 = vpop.permute.xlu0 %1894
      %1896 = vset.pattern.permute.xlu0 0
      %1897 = vperm.xlu0 %1896, %v1726
      %v1898 = vpop.permute.xlu0 %1897
      %1899 = vset.pattern.permute.xlu0 0
      %1900 = vperm.xlu0 %1899, %v1727
      %v1901 = vpop.permute.xlu0 %1900
      %1902 = vset.pattern.permute.xlu0 0
      %1903 = vperm.xlu0 %1902, %v1728
      %v1904 = vpop.permute.xlu0 %1903
      %1905 = vset.pattern.permute.xlu0 0
      %1906 = vperm.xlu0 %1905, %v1729
      %v1907 = vpop.permute.xlu0 %1906
      %1908 = vset.pattern.permute.xlu0 0
      %1909 = vperm.xlu0 %1908, %v1730
      %v1910 = vpop.permute.xlu0 %1909
      %1911 = vset.pattern.permute.xlu0 0
      %1912 = vperm.xlu0 %1911, %v1731
      %v1913 = vpop.permute.xlu0 %1912
      %1914 = vset.pattern.permute.xlu0 0
      %1915 = vperm.xlu0 %1914, %v1732
      %v1916 = vpop.permute.xlu0 %1915
      %1917 = vset.pattern.permute.xlu0 0
      %1918 = vperm.xlu0 %1917, %v1733
      %v1919 = vpop.permute.xlu0 %1918
      %1920 = vset.pattern.permute.xlu0 0
      %1921 = vperm.xlu0 %1920, %v1734
      %v1922 = vpop.permute.xlu0 %1921
      %1923 = vset.pattern.permute.xlu0 0
      %1924 = vperm.xlu0 %1923, %v1735
      %v1925 = vpop.permute.xlu0 %1924
      %1926 = vset.pattern.permute.xlu0 0
      %1927 = vperm.xlu0 %1926, %v1736
      %v1928 = vpop.permute.xlu0 %1927
      %1929 = vset.pattern.permute.xlu0 0
      %1930 = vperm.xlu0 %1929, %v1737
      %v1931 = vpop.permute.xlu0 %1930
      %vm1932 = vcmp.eq.s32.totalorder %v1739, %v1742
      %vm1933 = vcmp.eq.s32.totalorder %v1739, %v1745
      %vm1934 = vcmp.eq.s32.totalorder %v1739, %v1748
      %vm1935 = vcmp.eq.s32.totalorder %v1739, %v1751
      %vm1936 = vcmp.eq.s32.totalorder %v1739, %v1754
      %vm1937 = vcmp.eq.s32.totalorder %v1739, %v1757
      %vm1938 = vcmp.eq.s32.totalorder %v1739, %v1760
      %vm1939 = vcmp.eq.s32.totalorder %v1739, %v1763
      %vm1940 = vcmp.eq.s32.totalorder %v1739, %v1766
      %vm1941 = vcmp.eq.s32.totalorder %v1739, %v1769
      %vm1942 = vcmp.eq.s32.totalorder %v1739, %v1772
      %vm1943 = vcmp.eq.s32.totalorder %v1739, %v1775
      %vm1944 = vcmp.eq.s32.totalorder %v1739, %v1778
      %vm1945 = vcmp.eq.s32.totalorder %v1739, %v1781
      %vm1946 = vcmp.eq.s32.totalorder %v1739, %v1784
      %vm1947 = vcmp.eq.s32.totalorder %v1739, %v1787
      %vm1948 = vcmp.eq.s32.totalorder %v1739, %v1790
      %vm1949 = vcmp.eq.s32.totalorder %v1739, %v1793
      %vm1950 = vcmp.eq.s32.totalorder %v1739, %v1796
      %vm1951 = vcmp.eq.s32.totalorder %v1739, %v1799
      %vm1952 = vcmp.eq.s32.totalorder %v1739, %v1802
      %vm1953 = vcmp.eq.s32.totalorder %v1739, %v1805
      %vm1954 = vcmp.eq.s32.totalorder %v1739, %v1808
      %vm1955 = vcmp.eq.s32.totalorder %v1739, %v1811
      %vm1956 = vcmp.eq.s32.totalorder %v1739, %v1814
      %vm1957 = vcmp.eq.s32.totalorder %v1739, %v1817
      %vm1958 = vcmp.eq.s32.totalorder %v1739, %v1820
      %vm1959 = vcmp.eq.s32.totalorder %v1739, %v1823
      %vm1960 = vcmp.eq.s32.totalorder %v1739, %v1826
      %vm1961 = vcmp.eq.s32.totalorder %v1739, %v1829
      %vm1962 = vcmp.eq.s32.totalorder %v1739, %v1832
      %vm1963 = vcmp.eq.s32.totalorder %v1739, %v1835
      %vm1964 = vcmp.eq.s32.totalorder %v1739, %v1838
      %vm1965 = vcmp.eq.s32.totalorder %v1739, %v1841
      %vm1966 = vcmp.eq.s32.totalorder %v1739, %v1844
      %vm1967 = vcmp.eq.s32.totalorder %v1739, %v1847
      %vm1968 = vcmp.eq.s32.totalorder %v1739, %v1850
      %vm1969 = vcmp.eq.s32.totalorder %v1739, %v1853
      %vm1970 = vcmp.eq.s32.totalorder %v1739, %v1856
      %vm1971 = vcmp.eq.s32.totalorder %v1739, %v1859
      %vm1972 = vcmp.eq.s32.totalorder %v1739, %v1862
      %vm1973 = vcmp.eq.s32.totalorder %v1739, %v1865
      %vm1974 = vcmp.eq.s32.totalorder %v1739, %v1868
      %vm1975 = vcmp.eq.s32.totalorder %v1739, %v1871
      %vm1976 = vcmp.eq.s32.totalorder %v1739, %v1874
      %vm1977 = vcmp.eq.s32.totalorder %v1739, %v1877
      %vm1978 = vcmp.eq.s32.totalorder %v1739, %v1880
      %vm1979 = vcmp.eq.s32.totalorder %v1739, %v1883
      %vm1980 = vcmp.eq.s32.totalorder %v1739, %v1886
      %vm1981 = vcmp.eq.s32.totalorder %v1739, %v1889
      %vm1982 = vcmp.eq.s32.totalorder %v1739, %v1892
      %vm1983 = vcmp.eq.s32.totalorder %v1739, %v1895
      %vm1984 = vcmp.eq.s32.totalorder %v1739, %v1898
      %vm1985 = vcmp.eq.s32.totalorder %v1739, %v1901
      %vm1986 = vcmp.eq.s32.totalorder %v1739, %v1904
      %vm1987 = vcmp.eq.s32.totalorder %v1739, %v1907
      %vm1988 = vcmp.eq.s32.totalorder %v1739, %v1910
      %vm1989 = vcmp.eq.s32.totalorder %v1739, %v1913
      %vm1990 = vcmp.eq.s32.totalorder %v1739, %v1916
      %vm1991 = vcmp.eq.s32.totalorder %v1739, %v1919
      %vm1992 = vcmp.eq.s32.totalorder %v1739, %v1922
      %vm1993 = vcmp.eq.s32.totalorder %v1739, %v1925
      %vm1994 = vcmp.eq.s32.totalorder %v1739, %v1928
      %vm1995 = vcmp.eq.s32.totalorder %v1739, %v1931
      %v1996 = vsel %vm1932, %v780, 0.0
      %v1997 = vsel %vm1933, %v783, 0.0
      %v1998 = vsel %vm1934, %v788, 0.0
      %v1999 = vsel %vm1935, %v791, 0.0
      %v2000 = vsel %vm1936, %v796, 0.0
      %v2001 = vsel %vm1937, %v799, 0.0
      %v2002 = vsel %vm1938, %v804, 0.0
      %v2003 = vsel %vm1939, %v807, 0.0
      %v2004 = vsel %vm1940, %v812, 0.0
      %v2005 = vsel %vm1941, %v815, 0.0
      %v2006 = vsel %vm1942, %v820, 0.0
      %v2007 = vsel %vm1943, %v823, 0.0
      %v2008 = vsel %vm1944, %v828, 0.0
      %v2009 = vsel %vm1945, %v831, 0.0
      %v2010 = vsel %vm1946, %v836, 0.0
      %v2011 = vsel %vm1947, %v839, 0.0
      %v2012 = vsel %vm1948, %v844, 0.0
      %v2013 = vsel %vm1949, %v847, 0.0
      %v2014 = vsel %vm1950, %v852, 0.0
      %v2015 = vsel %vm1951, %v855, 0.0
      %v2016 = vsel %vm1952, %v860, 0.0
      %v2017 = vsel %vm1953, %v863, 0.0
      %v2018 = vsel %vm1954, %v868, 0.0
      %v2019 = vsel %vm1955, %v871, 0.0
      %v2020 = vsel %vm1956, %v876, 0.0
      %v2021 = vsel %vm1957, %v879, 0.0
      %v2022 = vsel %vm1958, %v884, 0.0
      %v2023 = vsel %vm1959, %v887, 0.0
      %v2024 = vsel %vm1960, %v892, 0.0
      %v2025 = vsel %vm1961, %v895, 0.0
      %v2026 = vsel %vm1962, %v900, 0.0
      %v2027 = vsel %vm1963, %v903, 0.0
      %v2028 = vsel %vm1964, %v908, 0.0
      %v2029 = vsel %vm1965, %v911, 0.0
      %v2030 = vsel %vm1966, %v916, 0.0
      %v2031 = vsel %vm1967, %v919, 0.0
      %v2032 = vsel %vm1968, %v924, 0.0
      %v2033 = vsel %vm1969, %v927, 0.0
      %v2034 = vsel %vm1970, %v932, 0.0
      %v2035 = vsel %vm1971, %v935, 0.0
      %v2036 = vsel %vm1972, %v940, 0.0
      %v2037 = vsel %vm1973, %v943, 0.0
      %v2038 = vsel %vm1974, %v948, 0.0
      %v2039 = vsel %vm1975, %v951, 0.0
      %v2040 = vsel %vm1976, %v956, 0.0
      %v2041 = vsel %vm1977, %v959, 0.0
      %v2042 = vsel %vm1978, %v964, 0.0
      %v2043 = vsel %vm1979, %v967, 0.0
      %v2044 = vsel %vm1980, %v972, 0.0
      %v2045 = vsel %vm1981, %v975, 0.0
      %v2046 = vsel %vm1982, %v980, 0.0
      %v2047 = vsel %vm1983, %v983, 0.0
      %v2048 = vsel %vm1984, %v988, 0.0
      %v2049 = vsel %vm1985, %v991, 0.0
      %v2050 = vsel %vm1986, %v996, 0.0
      %v2051 = vsel %vm1987, %v999, 0.0
      %v2052 = vsel %vm1988, %v1004, 0.0
      %v2053 = vsel %vm1989, %v1007, 0.0
      %v2054 = vsel %vm1990, %v1012, 0.0
      %v2055 = vsel %vm1991, %v1015, 0.0
      %v2056 = vsel %vm1992, %v1020, 0.0
      %v2057 = vsel %vm1993, %v1023, 0.0
      %v2058 = vsel %vm1994, %v1028, 0.0
      %v2059 = vsel %vm1995, %v1031, 0.0
      %2060 = vadd.xlane.f32.xlu0 %v1996
      %v2061 = vpop.xlane.xlu0 %2060
      %2062 = vadd.xlane.f32.xlu0 %v1997
      %v2063 = vpop.xlane.xlu0 %2062
      %2064 = vadd.xlane.f32.xlu0 %v1998
      %v2065 = vpop.xlane.xlu0 %2064
      %2066 = vadd.xlane.f32.xlu0 %v1999
      %v2067 = vpop.xlane.xlu0 %2066
      %2068 = vadd.xlane.f32.xlu0 %v2000
      %v2069 = vpop.xlane.xlu0 %2068
      %2070 = vadd.xlane.f32.xlu0 %v2001
      %v2071 = vpop.xlane.xlu0 %2070
      %2072 = vadd.xlane.f32.xlu0 %v2002
      %v2073 = vpop.xlane.xlu0 %2072
      %2074 = vadd.xlane.f32.xlu0 %v2003
      %v2075 = vpop.xlane.xlu0 %2074
      %2076 = vadd.xlane.f32.xlu0 %v2004
      %v2077 = vpop.xlane.xlu0 %2076
      %2078 = vadd.xlane.f32.xlu0 %v2005
      %v2079 = vpop.xlane.xlu0 %2078
      %2080 = vadd.xlane.f32.xlu0 %v2006
      %v2081 = vpop.xlane.xlu0 %2080
      %2082 = vadd.xlane.f32.xlu0 %v2007
      %v2083 = vpop.xlane.xlu0 %2082
      %2084 = vadd.xlane.f32.xlu0 %v2008
      %v2085 = vpop.xlane.xlu0 %2084
      %2086 = vadd.xlane.f32.xlu0 %v2009
      %v2087 = vpop.xlane.xlu0 %2086
      %2088 = vadd.xlane.f32.xlu0 %v2010
      %v2089 = vpop.xlane.xlu0 %2088
      %2090 = vadd.xlane.f32.xlu0 %v2011
      %v2091 = vpop.xlane.xlu0 %2090
      %2092 = vadd.xlane.f32.xlu0 %v2012
      %v2093 = vpop.xlane.xlu0 %2092
      %2094 = vadd.xlane.f32.xlu0 %v2013
      %v2095 = vpop.xlane.xlu0 %2094
      %2096 = vadd.xlane.f32.xlu0 %v2014
      %v2097 = vpop.xlane.xlu0 %2096
      %2098 = vadd.xlane.f32.xlu0 %v2015
      %v2099 = vpop.xlane.xlu0 %2098
      %2100 = vadd.xlane.f32.xlu0 %v2016
      %v2101 = vpop.xlane.xlu0 %2100
      %2102 = vadd.xlane.f32.xlu0 %v2017
      %v2103 = vpop.xlane.xlu0 %2102
      %2104 = vadd.xlane.f32.xlu0 %v2018
      %v2105 = vpop.xlane.xlu0 %2104
      %2106 = vadd.xlane.f32.xlu0 %v2019
      %v2107 = vpop.xlane.xlu0 %2106
      %2108 = vadd.xlane.f32.xlu0 %v2020
      %v2109 = vpop.xlane.xlu0 %2108
      %2110 = vadd.xlane.f32.xlu0 %v2021
      %v2111 = vpop.xlane.xlu0 %2110
      %2112 = vadd.xlane.f32.xlu0 %v2022
      %v2113 = vpop.xlane.xlu0 %2112
      %2114 = vadd.xlane.f32.xlu0 %v2023
      %v2115 = vpop.xlane.xlu0 %2114
      %2116 = vadd.xlane.f32.xlu0 %v2024
      %v2117 = vpop.xlane.xlu0 %2116
      %2118 = vadd.xlane.f32.xlu0 %v2025
      %v2119 = vpop.xlane.xlu0 %2118
      %2120 = vadd.xlane.f32.xlu0 %v2026
      %v2121 = vpop.xlane.xlu0 %2120
      %2122 = vadd.xlane.f32.xlu0 %v2027
      %v2123 = vpop.xlane.xlu0 %2122
      %2124 = vadd.xlane.f32.xlu0 %v2028
      %v2125 = vpop.xlane.xlu0 %2124
      %2126 = vadd.xlane.f32.xlu0 %v2029
      %v2127 = vpop.xlane.xlu0 %2126
      %2128 = vadd.xlane.f32.xlu0 %v2030
      %v2129 = vpop.xlane.xlu0 %2128
      %2130 = vadd.xlane.f32.xlu0 %v2031
      %v2131 = vpop.xlane.xlu0 %2130
      %2132 = vadd.xlane.f32.xlu0 %v2032
      %v2133 = vpop.xlane.xlu0 %2132
      %2134 = vadd.xlane.f32.xlu0 %v2033
      %v2135 = vpop.xlane.xlu0 %2134
      %2136 = vadd.xlane.f32.xlu0 %v2034
      %v2137 = vpop.xlane.xlu0 %2136
      %2138 = vadd.xlane.f32.xlu0 %v2035
      %v2139 = vpop.xlane.xlu0 %2138
      %2140 = vadd.xlane.f32.xlu0 %v2036
      %v2141 = vpop.xlane.xlu0 %2140
      %2142 = vadd.xlane.f32.xlu0 %v2037
      %v2143 = vpop.xlane.xlu0 %2142
      %2144 = vadd.xlane.f32.xlu0 %v2038
      %v2145 = vpop.xlane.xlu0 %2144
      %2146 = vadd.xlane.f32.xlu0 %v2039
      %v2147 = vpop.xlane.xlu0 %2146
      %2148 = vadd.xlane.f32.xlu0 %v2040
      %v2149 = vpop.xlane.xlu0 %2148
      %2150 = vadd.xlane.f32.xlu0 %v2041
      %v2151 = vpop.xlane.xlu0 %2150
      %2152 = vadd.xlane.f32.xlu0 %v2042
      %v2153 = vpop.xlane.xlu0 %2152
      %2154 = vadd.xlane.f32.xlu0 %v2043
      %v2155 = vpop.xlane.xlu0 %2154
      %2156 = vadd.xlane.f32.xlu0 %v2044
      %v2157 = vpop.xlane.xlu0 %2156
      %2158 = vadd.xlane.f32.xlu0 %v2045
      %v2159 = vpop.xlane.xlu0 %2158
      %2160 = vadd.xlane.f32.xlu0 %v2046
      %v2161 = vpop.xlane.xlu0 %2160
      %2162 = vadd.xlane.f32.xlu0 %v2047
      %v2163 = vpop.xlane.xlu0 %2162
      %2164 = vadd.xlane.f32.xlu0 %v2048
      %v2165 = vpop.xlane.xlu0 %2164
      %2166 = vadd.xlane.f32.xlu0 %v2049
      %v2167 = vpop.xlane.xlu0 %2166
      %2168 = vadd.xlane.f32.xlu0 %v2050
      %v2169 = vpop.xlane.xlu0 %2168
      %2170 = vadd.xlane.f32.xlu0 %v2051
      %v2171 = vpop.xlane.xlu0 %2170
      %2172 = vadd.xlane.f32.xlu0 %v2052
      %v2173 = vpop.xlane.xlu0 %2172
      %2174 = vadd.xlane.f32.xlu0 %v2053
      %v2175 = vpop.xlane.xlu0 %2174
      %2176 = vadd.xlane.f32.xlu0 %v2054
      %v2177 = vpop.xlane.xlu0 %2176
      %2178 = vadd.xlane.f32.xlu0 %v2055
      %v2179 = vpop.xlane.xlu0 %2178
      %2180 = vadd.xlane.f32.xlu0 %v2056
      %v2181 = vpop.xlane.xlu0 %2180
      %2182 = vadd.xlane.f32.xlu0 %v2057
      %v2183 = vpop.xlane.xlu0 %2182
      %2184 = vadd.xlane.f32.xlu0 %v2058
      %v2185 = vpop.xlane.xlu0 %2184
      %2186 = vadd.xlane.f32.xlu0 %v2059
      %v2187 = vpop.xlane.xlu0 %2186
      %v2188 = vsub.f32 %v1610, %v2061
      %v2189 = vsub.f32 %v1611, %v2063
      %v2190 = vsub.f32 %v1612, %v2065
      %v2191 = vsub.f32 %v1613, %v2067
      %v2192 = vsub.f32 %v1614, %v2069
      %v2193 = vsub.f32 %v1615, %v2071
      %v2194 = vsub.f32 %v1616, %v2073
      %v2195 = vsub.f32 %v1617, %v2075
      %v2196 = vsub.f32 %v1618, %v2077
      %v2197 = vsub.f32 %v1619, %v2079
      %v2198 = vsub.f32 %v1620, %v2081
      %v2199 = vsub.f32 %v1621, %v2083
      %v2200 = vsub.f32 %v1622, %v2085
      %v2201 = vsub.f32 %v1623, %v2087
      %v2202 = vsub.f32 %v1624, %v2089
      %v2203 = vsub.f32 %v1625, %v2091
      %v2204 = vsub.f32 %v1626, %v2093
      %v2205 = vsub.f32 %v1627, %v2095
      %v2206 = vsub.f32 %v1628, %v2097
      %v2207 = vsub.f32 %v1629, %v2099
      %v2208 = vsub.f32 %v1630, %v2101
      %v2209 = vsub.f32 %v1631, %v2103
      %v2210 = vsub.f32 %v1632, %v2105
      %v2211 = vsub.f32 %v1633, %v2107
      %v2212 = vsub.f32 %v1634, %v2109
      %v2213 = vsub.f32 %v1635, %v2111
      %v2214 = vsub.f32 %v1636, %v2113
      %v2215 = vsub.f32 %v1637, %v2115
      %v2216 = vsub.f32 %v1638, %v2117
      %v2217 = vsub.f32 %v1639, %v2119
      %v2218 = vsub.f32 %v1640, %v2121
      %v2219 = vsub.f32 %v1641, %v2123
      %v2220 = vsub.f32 %v1642, %v2125
      %v2221 = vsub.f32 %v1643, %v2127
      %v2222 = vsub.f32 %v1644, %v2129
      %v2223 = vsub.f32 %v1645, %v2131
      %v2224 = vsub.f32 %v1646, %v2133
      %v2225 = vsub.f32 %v1647, %v2135
      %v2226 = vsub.f32 %v1648, %v2137
      %v2227 = vsub.f32 %v1649, %v2139
      %v2228 = vsub.f32 %v1650, %v2141
      %v2229 = vsub.f32 %v1651, %v2143
      %v2230 = vsub.f32 %v1652, %v2145
      %v2231 = vsub.f32 %v1653, %v2147
      %v2232 = vsub.f32 %v1654, %v2149
      %v2233 = vsub.f32 %v1655, %v2151
      %v2234 = vsub.f32 %v1656, %v2153
      %v2235 = vsub.f32 %v1657, %v2155
      %v2236 = vsub.f32 %v1658, %v2157
      %v2237 = vsub.f32 %v1659, %v2159
      %v2238 = vsub.f32 %v1660, %v2161
      %v2239 = vsub.f32 %v1661, %v2163
      %v2240 = vsub.f32 %v1662, %v2165
      %v2241 = vsub.f32 %v1663, %v2167
      %v2242 = vsub.f32 %v1664, %v2169
      %v2243 = vsub.f32 %v1665, %v2171
      %v2244 = vsub.f32 %v1666, %v2173
      %v2245 = vsub.f32 %v1667, %v2175
      %v2246 = vsub.f32 %v1668, %v2177
      %v2247 = vsub.f32 %v1669, %v2179
      %v2248 = vsub.f32 %v1670, %v2181
      %v2249 = vsub.f32 %v1671, %v2183
      %v2250 = vsub.f32 %v1672, %v2185
      %v2251 = vsub.f32 %v1673, %v2187
      %v2252 = vmax.f32 %v2188, 1e-12
      %v2253 = vmax.f32 %v2189, 1e-12
      %v2254 = vmax.f32 %v2190, 1e-12
      %v2255 = vmax.f32 %v2191, 1e-12
      %v2256 = vmax.f32 %v2192, 1e-12
      %v2257 = vmax.f32 %v2193, 1e-12
      %v2258 = vmax.f32 %v2194, 1e-12
      %v2259 = vmax.f32 %v2195, 1e-12
      %v2260 = vmax.f32 %v2196, 1e-12
      %v2261 = vmax.f32 %v2197, 1e-12
      %v2262 = vmax.f32 %v2198, 1e-12
      %v2263 = vmax.f32 %v2199, 1e-12
      %v2264 = vmax.f32 %v2200, 1e-12
      %v2265 = vmax.f32 %v2201, 1e-12
      %v2266 = vmax.f32 %v2202, 1e-12
      %v2267 = vmax.f32 %v2203, 1e-12
      %v2268 = vmax.f32 %v2204, 1e-12
      %v2269 = vmax.f32 %v2205, 1e-12
      %v2270 = vmax.f32 %v2206, 1e-12
      %v2271 = vmax.f32 %v2207, 1e-12
      %v2272 = vmax.f32 %v2208, 1e-12
      %v2273 = vmax.f32 %v2209, 1e-12
      %v2274 = vmax.f32 %v2210, 1e-12
      %v2275 = vmax.f32 %v2211, 1e-12
      %v2276 = vmax.f32 %v2212, 1e-12
      %v2277 = vmax.f32 %v2213, 1e-12
      %v2278 = vmax.f32 %v2214, 1e-12
      %v2279 = vmax.f32 %v2215, 1e-12
      %v2280 = vmax.f32 %v2216, 1e-12
      %v2281 = vmax.f32 %v2217, 1e-12
      %v2282 = vmax.f32 %v2218, 1e-12
      %v2283 = vmax.f32 %v2219, 1e-12
      %v2284 = vmax.f32 %v2220, 1e-12
      %v2285 = vmax.f32 %v2221, 1e-12
      %v2286 = vmax.f32 %v2222, 1e-12
      %v2287 = vmax.f32 %v2223, 1e-12
      %v2288 = vmax.f32 %v2224, 1e-12
      %v2289 = vmax.f32 %v2225, 1e-12
      %v2290 = vmax.f32 %v2226, 1e-12
      %v2291 = vmax.f32 %v2227, 1e-12
      %v2292 = vmax.f32 %v2228, 1e-12
      %v2293 = vmax.f32 %v2229, 1e-12
      %v2294 = vmax.f32 %v2230, 1e-12
      %v2295 = vmax.f32 %v2231, 1e-12
      %v2296 = vmax.f32 %v2232, 1e-12
      %v2297 = vmax.f32 %v2233, 1e-12
      %v2298 = vmax.f32 %v2234, 1e-12
      %v2299 = vmax.f32 %v2235, 1e-12
      %v2300 = vmax.f32 %v2236, 1e-12
      %v2301 = vmax.f32 %v2237, 1e-12
      %v2302 = vmax.f32 %v2238, 1e-12
      %v2303 = vmax.f32 %v2239, 1e-12
      %v2304 = vmax.f32 %v2240, 1e-12
      %v2305 = vmax.f32 %v2241, 1e-12
      %v2306 = vmax.f32 %v2242, 1e-12
      %v2307 = vmax.f32 %v2243, 1e-12
      %v2308 = vmax.f32 %v2244, 1e-12
      %v2309 = vmax.f32 %v2245, 1e-12
      %v2310 = vmax.f32 %v2246, 1e-12
      %v2311 = vmax.f32 %v2247, 1e-12
      %v2312 = vmax.f32 %v2248, 1e-12
      %v2313 = vmax.f32 %v2249, 1e-12
      %v2314 = vmax.f32 %v2250, 1e-12
      %v2315 = vmax.f32 %v2251, 1e-12
      %v2316 = vrcp.pop %v2252
      %v2317 = vrcp.pop %v2253
      %v2318 = vrcp.pop %v2254
      %v2319 = vrcp.pop %v2255
      %v2320 = vrcp.pop %v2256
      %v2321 = vrcp.pop %v2257
      %v2322 = vrcp.pop %v2258
      %v2323 = vrcp.pop %v2259
      %v2324 = vrcp.pop %v2260
      %v2325 = vrcp.pop %v2261
      %v2326 = vrcp.pop %v2262
      %v2327 = vrcp.pop %v2263
      %v2328 = vrcp.pop %v2264
      %v2329 = vrcp.pop %v2265
      %v2330 = vrcp.pop %v2266
      %v2331 = vrcp.pop %v2267
      %v2332 = vrcp.pop %v2268
      %v2333 = vrcp.pop %v2269
      %v2334 = vrcp.pop %v2270
      %v2335 = vrcp.pop %v2271
      %v2336 = vrcp.pop %v2272
      %v2337 = vrcp.pop %v2273
      %v2338 = vrcp.pop %v2274
      %v2339 = vrcp.pop %v2275
      %v2340 = vrcp.pop %v2276
      %v2341 = vrcp.pop %v2277
      %v2342 = vrcp.pop %v2278
      %v2343 = vrcp.pop %v2279
      %v2344 = vrcp.pop %v2280
      %v2345 = vrcp.pop %v2281
      %v2346 = vrcp.pop %v2282
      %v2347 = vrcp.pop %v2283
      %v2348 = vrcp.pop %v2284
      %v2349 = vrcp.pop %v2285
      %v2350 = vrcp.pop %v2286
      %v2351 = vrcp.pop %v2287
      %v2352 = vrcp.pop %v2288
      %v2353 = vrcp.pop %v2289
      %v2354 = vrcp.pop %v2290
      %v2355 = vrcp.pop %v2291
      %v2356 = vrcp.pop %v2292
      %v2357 = vrcp.pop %v2293
      %v2358 = vrcp.pop %v2294
      %v2359 = vrcp.pop %v2295
      %v2360 = vrcp.pop %v2296
      %v2361 = vrcp.pop %v2297
      %v2362 = vrcp.pop %v2298
      %v2363 = vrcp.pop %v2299
      %v2364 = vrcp.pop %v2300
      %v2365 = vrcp.pop %v2301
      %v2366 = vrcp.pop %v2302
      %v2367 = vrcp.pop %v2303
      %v2368 = vrcp.pop %v2304
      %v2369 = vrcp.pop %v2305
      %v2370 = vrcp.pop %v2306
      %v2371 = vrcp.pop %v2307
      %v2372 = vrcp.pop %v2308
      %v2373 = vrcp.pop %v2309
      %v2374 = vrcp.pop %v2310
      %v2375 = vrcp.pop %v2311
      %v2376 = vrcp.pop %v2312
      %v2377 = vrcp.pop %v2313
      %v2378 = vrcp.pop %v2314
      %v2379 = vrcp.pop %v2315
      %2380 = vset.pattern.permute.xlu0 1
      %2381 = vperm.xlu0 %2380, %v1674
      %v2382 = vpop.permute.xlu0 %2381
      %2383 = vset.pattern.permute.xlu0 1
      %2384 = vperm.xlu0 %2383, %v1675
      %v2385 = vpop.permute.xlu0 %2384
      %2386 = vset.pattern.permute.xlu0 1
      %2387 = vperm.xlu0 %2386, %v1676
      %v2388 = vpop.permute.xlu0 %2387
      %2389 = vset.pattern.permute.xlu0 1
      %2390 = vperm.xlu0 %2389, %v1677
      %v2391 = vpop.permute.xlu0 %2390
      %2392 = vset.pattern.permute.xlu0 1
      %2393 = vperm.xlu0 %2392, %v1678
      %v2394 = vpop.permute.xlu0 %2393
      %2395 = vset.pattern.permute.xlu0 1
      %2396 = vperm.xlu0 %2395, %v1679
      %v2397 = vpop.permute.xlu0 %2396
      %2398 = vset.pattern.permute.xlu0 1
      %2399 = vperm.xlu0 %2398, %v1680
      %v2400 = vpop.permute.xlu0 %2399
      %2401 = vset.pattern.permute.xlu0 1
      %2402 = vperm.xlu0 %2401, %v1681
      %v2403 = vpop.permute.xlu0 %2402
      %2404 = vset.pattern.permute.xlu0 1
      %2405 = vperm.xlu0 %2404, %v1682
      %v2406 = vpop.permute.xlu0 %2405
      %2407 = vset.pattern.permute.xlu0 1
      %2408 = vperm.xlu0 %2407, %v1683
      %v2409 = vpop.permute.xlu0 %2408
      %2410 = vset.pattern.permute.xlu0 1
      %2411 = vperm.xlu0 %2410, %v1684
      %v2412 = vpop.permute.xlu0 %2411
      %2413 = vset.pattern.permute.xlu0 1
      %2414 = vperm.xlu0 %2413, %v1685
      %v2415 = vpop.permute.xlu0 %2414
      %2416 = vset.pattern.permute.xlu0 1
      %2417 = vperm.xlu0 %2416, %v1686
      %v2418 = vpop.permute.xlu0 %2417
      %2419 = vset.pattern.permute.xlu0 1
      %2420 = vperm.xlu0 %2419, %v1687
      %v2421 = vpop.permute.xlu0 %2420
      %2422 = vset.pattern.permute.xlu0 1
      %2423 = vperm.xlu0 %2422, %v1688
      %v2424 = vpop.permute.xlu0 %2423
      %2425 = vset.pattern.permute.xlu0 1
      %2426 = vperm.xlu0 %2425, %v1689
      %v2427 = vpop.permute.xlu0 %2426
      %2428 = vset.pattern.permute.xlu0 1
      %2429 = vperm.xlu0 %2428, %v1690
      %v2430 = vpop.permute.xlu0 %2429
      %2431 = vset.pattern.permute.xlu0 1
      %2432 = vperm.xlu0 %2431, %v1691
      %v2433 = vpop.permute.xlu0 %2432
      %2434 = vset.pattern.permute.xlu0 1
      %2435 = vperm.xlu0 %2434, %v1692
      %v2436 = vpop.permute.xlu0 %2435
      %2437 = vset.pattern.permute.xlu0 1
      %2438 = vperm.xlu0 %2437, %v1693
      %v2439 = vpop.permute.xlu0 %2438
      %2440 = vset.pattern.permute.xlu0 1
      %2441 = vperm.xlu0 %2440, %v1694
      %v2442 = vpop.permute.xlu0 %2441
      %2443 = vset.pattern.permute.xlu0 1
      %2444 = vperm.xlu0 %2443, %v1695
      %v2445 = vpop.permute.xlu0 %2444
      %2446 = vset.pattern.permute.xlu0 1
      %2447 = vperm.xlu0 %2446, %v1696
      %v2448 = vpop.permute.xlu0 %2447
      %2449 = vset.pattern.permute.xlu0 1
      %2450 = vperm.xlu0 %2449, %v1697
      %v2451 = vpop.permute.xlu0 %2450
      %2452 = vset.pattern.permute.xlu0 1
      %2453 = vperm.xlu0 %2452, %v1698
      %v2454 = vpop.permute.xlu0 %2453
      %2455 = vset.pattern.permute.xlu0 1
      %2456 = vperm.xlu0 %2455, %v1699
      %v2457 = vpop.permute.xlu0 %2456
      %2458 = vset.pattern.permute.xlu0 1
      %2459 = vperm.xlu0 %2458, %v1700
      %v2460 = vpop.permute.xlu0 %2459
      %2461 = vset.pattern.permute.xlu0 1
      %2462 = vperm.xlu0 %2461, %v1701
      %v2463 = vpop.permute.xlu0 %2462
      %2464 = vset.pattern.permute.xlu0 1
      %2465 = vperm.xlu0 %2464, %v1702
      %v2466 = vpop.permute.xlu0 %2465
      %2467 = vset.pattern.permute.xlu0 1
      %2468 = vperm.xlu0 %2467, %v1703
      %v2469 = vpop.permute.xlu0 %2468
      %2470 = vset.pattern.permute.xlu0 1
      %2471 = vperm.xlu0 %2470, %v1704
      %v2472 = vpop.permute.xlu0 %2471
      %2473 = vset.pattern.permute.xlu0 1
      %2474 = vperm.xlu0 %2473, %v1705
      %v2475 = vpop.permute.xlu0 %2474
      %2476 = vset.pattern.permute.xlu0 1
      %2477 = vperm.xlu0 %2476, %v1706
      %v2478 = vpop.permute.xlu0 %2477
      %2479 = vset.pattern.permute.xlu0 1
      %2480 = vperm.xlu0 %2479, %v1707
      %v2481 = vpop.permute.xlu0 %2480
      %2482 = vset.pattern.permute.xlu0 1
      %2483 = vperm.xlu0 %2482, %v1708
      %v2484 = vpop.permute.xlu0 %2483
      %2485 = vset.pattern.permute.xlu0 1
      %2486 = vperm.xlu0 %2485, %v1709
      %v2487 = vpop.permute.xlu0 %2486
      %2488 = vset.pattern.permute.xlu0 1
      %2489 = vperm.xlu0 %2488, %v1710
      %v2490 = vpop.permute.xlu0 %2489
      %2491 = vset.pattern.permute.xlu0 1
      %2492 = vperm.xlu0 %2491, %v1711
      %v2493 = vpop.permute.xlu0 %2492
      %2494 = vset.pattern.permute.xlu0 1
      %2495 = vperm.xlu0 %2494, %v1712
      %v2496 = vpop.permute.xlu0 %2495
      %2497 = vset.pattern.permute.xlu0 1
      %2498 = vperm.xlu0 %2497, %v1713
      %v2499 = vpop.permute.xlu0 %2498
      %2500 = vset.pattern.permute.xlu0 1
      %2501 = vperm.xlu0 %2500, %v1714
      %v2502 = vpop.permute.xlu0 %2501
      %2503 = vset.pattern.permute.xlu0 1
      %2504 = vperm.xlu0 %2503, %v1715
      %v2505 = vpop.permute.xlu0 %2504
      %2506 = vset.pattern.permute.xlu0 1
      %2507 = vperm.xlu0 %2506, %v1716
      %v2508 = vpop.permute.xlu0 %2507
      %2509 = vset.pattern.permute.xlu0 1
      %2510 = vperm.xlu0 %2509, %v1717
      %v2511 = vpop.permute.xlu0 %2510
      %2512 = vset.pattern.permute.xlu0 1
      %2513 = vperm.xlu0 %2512, %v1718
      %v2514 = vpop.permute.xlu0 %2513
      %2515 = vset.pattern.permute.xlu0 1
      %2516 = vperm.xlu0 %2515, %v1719
      %v2517 = vpop.permute.xlu0 %2516
      %2518 = vset.pattern.permute.xlu0 1
      %2519 = vperm.xlu0 %2518, %v1720
      %v2520 = vpop.permute.xlu0 %2519
      %2521 = vset.pattern.permute.xlu0 1
      %2522 = vperm.xlu0 %2521, %v1721
      %v2523 = vpop.permute.xlu0 %2522
      %2524 = vset.pattern.permute.xlu0 1
      %2525 = vperm.xlu0 %2524, %v1722
      %v2526 = vpop.permute.xlu0 %2525
      %2527 = vset.pattern.permute.xlu0 1
      %2528 = vperm.xlu0 %2527, %v1723
      %v2529 = vpop.permute.xlu0 %2528
      %2530 = vset.pattern.permute.xlu0 1
      %2531 = vperm.xlu0 %2530, %v1724
      %v2532 = vpop.permute.xlu0 %2531
      %2533 = vset.pattern.permute.xlu0 1
      %2534 = vperm.xlu0 %2533, %v1725
      %v2535 = vpop.permute.xlu0 %2534
      %2536 = vset.pattern.permute.xlu0 1
      %2537 = vperm.xlu0 %2536, %v1726
      %v2538 = vpop.permute.xlu0 %2537
      %2539 = vset.pattern.permute.xlu0 1
      %2540 = vperm.xlu0 %2539, %v1727
      %v2541 = vpop.permute.xlu0 %2540
      %2542 = vset.pattern.permute.xlu0 1
      %2543 = vperm.xlu0 %2542, %v1728
      %v2544 = vpop.permute.xlu0 %2543
      %2545 = vset.pattern.permute.xlu0 1
      %2546 = vperm.xlu0 %2545, %v1729
      %v2547 = vpop.permute.xlu0 %2546
      %2548 = vset.pattern.permute.xlu0 1
      %2549 = vperm.xlu0 %2548, %v1730
      %v2550 = vpop.permute.xlu0 %2549
      %2551 = vset.pattern.permute.xlu0 1
      %2552 = vperm.xlu0 %2551, %v1731
      %v2553 = vpop.permute.xlu0 %2552
      %2554 = vset.pattern.permute.xlu0 1
      %2555 = vperm.xlu0 %2554, %v1732
      %v2556 = vpop.permute.xlu0 %2555
      %2557 = vset.pattern.permute.xlu0 1
      %2558 = vperm.xlu0 %2557, %v1733
      %v2559 = vpop.permute.xlu0 %2558
      %2560 = vset.pattern.permute.xlu0 1
      %2561 = vperm.xlu0 %2560, %v1734
      %v2562 = vpop.permute.xlu0 %2561
      %2563 = vset.pattern.permute.xlu0 1
      %2564 = vperm.xlu0 %2563, %v1735
      %v2565 = vpop.permute.xlu0 %2564
      %2566 = vset.pattern.permute.xlu0 1
      %2567 = vperm.xlu0 %2566, %v1736
      %v2568 = vpop.permute.xlu0 %2567
      %2569 = vset.pattern.permute.xlu0 1
      %2570 = vperm.xlu0 %2569, %v1737
      %v2571 = vpop.permute.xlu0 %2570
      %vm2572 = vcmp.eq.s32.totalorder %v1739, %v2382
      %vm2573 = vcmp.eq.s32.totalorder %v1739, %v2385
      %vm2574 = vcmp.eq.s32.totalorder %v1739, %v2388
      %vm2575 = vcmp.eq.s32.totalorder %v1739, %v2391
      %vm2576 = vcmp.eq.s32.totalorder %v1739, %v2394
      %vm2577 = vcmp.eq.s32.totalorder %v1739, %v2397
      %vm2578 = vcmp.eq.s32.totalorder %v1739, %v2400
      %vm2579 = vcmp.eq.s32.totalorder %v1739, %v2403
      %vm2580 = vcmp.eq.s32.totalorder %v1739, %v2406
      %vm2581 = vcmp.eq.s32.totalorder %v1739, %v2409
      %vm2582 = vcmp.eq.s32.totalorder %v1739, %v2412
      %vm2583 = vcmp.eq.s32.totalorder %v1739, %v2415
      %vm2584 = vcmp.eq.s32.totalorder %v1739, %v2418
      %vm2585 = vcmp.eq.s32.totalorder %v1739, %v2421
      %vm2586 = vcmp.eq.s32.totalorder %v1739, %v2424
      %vm2587 = vcmp.eq.s32.totalorder %v1739, %v2427
      %vm2588 = vcmp.eq.s32.totalorder %v1739, %v2430
      %vm2589 = vcmp.eq.s32.totalorder %v1739, %v2433
      %vm2590 = vcmp.eq.s32.totalorder %v1739, %v2436
      %vm2591 = vcmp.eq.s32.totalorder %v1739, %v2439
      %vm2592 = vcmp.eq.s32.totalorder %v1739, %v2442
      %vm2593 = vcmp.eq.s32.totalorder %v1739, %v2445
      %vm2594 = vcmp.eq.s32.totalorder %v1739, %v2448
      %vm2595 = vcmp.eq.s32.totalorder %v1739, %v2451
      %vm2596 = vcmp.eq.s32.totalorder %v1739, %v2454
      %vm2597 = vcmp.eq.s32.totalorder %v1739, %v2457
      %vm2598 = vcmp.eq.s32.totalorder %v1739, %v2460
      %vm2599 = vcmp.eq.s32.totalorder %v1739, %v2463
      %vm2600 = vcmp.eq.s32.totalorder %v1739, %v2466
      %vm2601 = vcmp.eq.s32.totalorder %v1739, %v2469
      %vm2602 = vcmp.eq.s32.totalorder %v1739, %v2472
      %vm2603 = vcmp.eq.s32.totalorder %v1739, %v2475
      %vm2604 = vcmp.eq.s32.totalorder %v1739, %v2478
      %vm2605 = vcmp.eq.s32.totalorder %v1739, %v2481
      %vm2606 = vcmp.eq.s32.totalorder %v1739, %v2484
      %vm2607 = vcmp.eq.s32.totalorder %v1739, %v2487
      %vm2608 = vcmp.eq.s32.totalorder %v1739, %v2490
      %vm2609 = vcmp.eq.s32.totalorder %v1739, %v2493
      %vm2610 = vcmp.eq.s32.totalorder %v1739, %v2496
      %vm2611 = vcmp.eq.s32.totalorder %v1739, %v2499
      %vm2612 = vcmp.eq.s32.totalorder %v1739, %v2502
      %vm2613 = vcmp.eq.s32.totalorder %v1739, %v2505
      %vm2614 = vcmp.eq.s32.totalorder %v1739, %v2508
      %vm2615 = vcmp.eq.s32.totalorder %v1739, %v2511
      %vm2616 = vcmp.eq.s32.totalorder %v1739, %v2514
      %vm2617 = vcmp.eq.s32.totalorder %v1739, %v2517
      %vm2618 = vcmp.eq.s32.totalorder %v1739, %v2520
      %vm2619 = vcmp.eq.s32.totalorder %v1739, %v2523
      %vm2620 = vcmp.eq.s32.totalorder %v1739, %v2526
      %vm2621 = vcmp.eq.s32.totalorder %v1739, %v2529
      %vm2622 = vcmp.eq.s32.totalorder %v1739, %v2532
      %vm2623 = vcmp.eq.s32.totalorder %v1739, %v2535
      %vm2624 = vcmp.eq.s32.totalorder %v1739, %v2538
      %vm2625 = vcmp.eq.s32.totalorder %v1739, %v2541
      %vm2626 = vcmp.eq.s32.totalorder %v1739, %v2544
      %vm2627 = vcmp.eq.s32.totalorder %v1739, %v2547
      %vm2628 = vcmp.eq.s32.totalorder %v1739, %v2550
      %vm2629 = vcmp.eq.s32.totalorder %v1739, %v2553
      %vm2630 = vcmp.eq.s32.totalorder %v1739, %v2556
      %vm2631 = vcmp.eq.s32.totalorder %v1739, %v2559
      %vm2632 = vcmp.eq.s32.totalorder %v1739, %v2562
      %vm2633 = vcmp.eq.s32.totalorder %v1739, %v2565
      %vm2634 = vcmp.eq.s32.totalorder %v1739, %v2568
      %vm2635 = vcmp.eq.s32.totalorder %v1739, %v2571
      %vm2636 = vcmp.eq.s32.totalorder %v1739, 127
      %vm2637 = vmor %vm2572, %vm2636
      %vm2638 = vmor %vm2573, %vm2636
      %vm2639 = vmor %vm2574, %vm2636
      %vm2640 = vmor %vm2575, %vm2636
      %vm2641 = vmor %vm2576, %vm2636
      %vm2642 = vmor %vm2577, %vm2636
      %vm2643 = vmor %vm2578, %vm2636
      %vm2644 = vmor %vm2579, %vm2636
      %vm2645 = vmor %vm2580, %vm2636
      %vm2646 = vmor %vm2581, %vm2636
      %vm2647 = vmor %vm2582, %vm2636
      %vm2648 = vmor %vm2583, %vm2636
      %vm2649 = vmor %vm2584, %vm2636
      %vm2650 = vmor %vm2585, %vm2636
      %vm2651 = vmor %vm2586, %vm2636
      %vm2652 = vmor %vm2587, %vm2636
      %vm2653 = vmor %vm2588, %vm2636
      %vm2654 = vmor %vm2589, %vm2636
      %vm2655 = vmor %vm2590, %vm2636
      %vm2656 = vmor %vm2591, %vm2636
      %vm2657 = vmor %vm2592, %vm2636
      %vm2658 = vmor %vm2593, %vm2636
      %vm2659 = vmor %vm2594, %vm2636
      %vm2660 = vmor %vm2595, %vm2636
      %vm2661 = vmor %vm2596, %vm2636
      %vm2662 = vmor %vm2597, %vm2636
      %vm2663 = vmor %vm2598, %vm2636
      %vm2664 = vmor %vm2599, %vm2636
      %vm2665 = vmor %vm2600, %vm2636
      %vm2666 = vmor %vm2601, %vm2636
      %vm2667 = vmor %vm2602, %vm2636
      %vm2668 = vmor %vm2603, %vm2636
      %vm2669 = vmor %vm2604, %vm2636
      %vm2670 = vmor %vm2605, %vm2636
      %vm2671 = vmor %vm2606, %vm2636
      %vm2672 = vmor %vm2607, %vm2636
      %vm2673 = vmor %vm2608, %vm2636
      %vm2674 = vmor %vm2609, %vm2636
      %vm2675 = vmor %vm2610, %vm2636
      %vm2676 = vmor %vm2611, %vm2636
      %vm2677 = vmor %vm2612, %vm2636
      %vm2678 = vmor %vm2613, %vm2636
      %vm2679 = vmor %vm2614, %vm2636
      %vm2680 = vmor %vm2615, %vm2636
      %vm2681 = vmor %vm2616, %vm2636
      %vm2682 = vmor %vm2617, %vm2636
      %vm2683 = vmor %vm2618, %vm2636
      %vm2684 = vmor %vm2619, %vm2636
      %vm2685 = vmor %vm2620, %vm2636
      %vm2686 = vmor %vm2621, %vm2636
      %vm2687 = vmor %vm2622, %vm2636
      %vm2688 = vmor %vm2623, %vm2636
      %vm2689 = vmor %vm2624, %vm2636
      %vm2690 = vmor %vm2625, %vm2636
      %vm2691 = vmor %vm2626, %vm2636
      %vm2692 = vmor %vm2627, %vm2636
      %vm2693 = vmor %vm2628, %vm2636
      %vm2694 = vmor %vm2629, %vm2636
      %vm2695 = vmor %vm2630, %vm2636
      %vm2696 = vmor %vm2631, %vm2636
      %vm2697 = vmor %vm2632, %vm2636
      %vm2698 = vmor %vm2633, %vm2636
      %vm2699 = vmor %vm2634, %vm2636
      %vm2700 = vmor %vm2635, %vm2636
      %v2701 = vsel %vm465, 1, 0
      %v2702 = vsel %vm466, 1, 0
      %v2703 = vsel %vm467, 1, 0
      %v2704 = vsel %vm468, 1, 0
      %v2705 = vsel %vm469, 1, 0
      %v2706 = vsel %vm470, 1, 0
      %v2707 = vsel %vm471, 1, 0
      %v2708 = vsel %vm472, 1, 0
      %v2709 = vsel %vm473, 1, 0
      %v2710 = vsel %vm474, 1, 0
      %v2711 = vsel %vm475, 1, 0
      %v2712 = vsel %vm476, 1, 0
      %v2713 = vsel %vm477, 1, 0
      %v2714 = vsel %vm478, 1, 0
      %v2715 = vsel %vm479, 1, 0
      %v2716 = vsel %vm480, 1, 0
      %v2717 = vsel %vm481, 1, 0
      %v2718 = vsel %vm482, 1, 0
      %v2719 = vsel %vm483, 1, 0
      %v2720 = vsel %vm484, 1, 0
      %v2721 = vsel %vm485, 1, 0
      %v2722 = vsel %vm486, 1, 0
      %v2723 = vsel %vm487, 1, 0
      %v2724 = vsel %vm488, 1, 0
      %v2725 = vsel %vm489, 1, 0
      %v2726 = vsel %vm490, 1, 0
      %v2727 = vsel %vm491, 1, 0
      %v2728 = vsel %vm492, 1, 0
      %v2729 = vsel %vm493, 1, 0
      %v2730 = vsel %vm494, 1, 0
      %v2731 = vsel %vm495, 1, 0
      %v2732 = vsel %vm496, 1, 0
      %v2733 = vsel %vm497, 1, 0
      %v2734 = vsel %vm498, 1, 0
      %v2735 = vsel %vm499, 1, 0
      %v2736 = vsel %vm500, 1, 0
      %v2737 = vsel %vm501, 1, 0
      %v2738 = vsel %vm502, 1, 0
      %v2739 = vsel %vm503, 1, 0
      %v2740 = vsel %vm504, 1, 0
      %v2741 = vsel %vm505, 1, 0
      %v2742 = vsel %vm506, 1, 0
      %v2743 = vsel %vm507, 1, 0
      %v2744 = vsel %vm508, 1, 0
      %v2745 = vsel %vm509, 1, 0
      %v2746 = vsel %vm510, 1, 0
      %v2747 = vsel %vm511, 1, 0
      %v2748 = vsel %vm512, 1, 0
      %v2749 = vsel %vm513, 1, 0
      %v2750 = vsel %vm514, 1, 0
      %v2751 = vsel %vm515, 1, 0
      %v2752 = vsel %vm516, 1, 0
      %v2753 = vsel %vm517, 1, 0
      %v2754 = vsel %vm518, 1, 0
      %v2755 = vsel %vm519, 1, 0
      %v2756 = vsel %vm520, 1, 0
      %v2757 = vsel %vm521, 1, 0
      %v2758 = vsel %vm522, 1, 0
      %v2759 = vsel %vm523, 1, 0
      %v2760 = vsel %vm524, 1, 0
      %v2761 = vsel %vm525, 1, 0
      %v2762 = vsel %vm526, 1, 0
      %v2763 = vsel %vm527, 1, 0
      %v2764 = vsel %vm528, 1, 0
      %vm2765 = vcmp.eq.s32.totalorder %v2701, 1
      %vm2766 = vcmp.eq.s32.totalorder %v2702, 1
      %vm2767 = vcmp.eq.s32.totalorder %v2703, 1
      %vm2768 = vcmp.eq.s32.totalorder %v2704, 1
      %vm2769 = vcmp.eq.s32.totalorder %v2705, 1
      %vm2770 = vcmp.eq.s32.totalorder %v2706, 1
      %vm2771 = vcmp.eq.s32.totalorder %v2707, 1
      %vm2772 = vcmp.eq.s32.totalorder %v2708, 1
      %vm2773 = vcmp.eq.s32.totalorder %v2709, 1
      %vm2774 = vcmp.eq.s32.totalorder %v2710, 1
      %vm2775 = vcmp.eq.s32.totalorder %v2711, 1
      %vm2776 = vcmp.eq.s32.totalorder %v2712, 1
      %vm2777 = vcmp.eq.s32.totalorder %v2713, 1
      %vm2778 = vcmp.eq.s32.totalorder %v2714, 1
      %vm2779 = vcmp.eq.s32.totalorder %v2715, 1
      %vm2780 = vcmp.eq.s32.totalorder %v2716, 1
      %vm2781 = vcmp.eq.s32.totalorder %v2717, 1
      %vm2782 = vcmp.eq.s32.totalorder %v2718, 1
      %vm2783 = vcmp.eq.s32.totalorder %v2719, 1
      %vm2784 = vcmp.eq.s32.totalorder %v2720, 1
      %vm2785 = vcmp.eq.s32.totalorder %v2721, 1
      %vm2786 = vcmp.eq.s32.totalorder %v2722, 1
      %vm2787 = vcmp.eq.s32.totalorder %v2723, 1
      %vm2788 = vcmp.eq.s32.totalorder %v2724, 1
      %vm2789 = vcmp.eq.s32.totalorder %v2725, 1
      %vm2790 = vcmp.eq.s32.totalorder %v2726, 1
      %vm2791 = vcmp.eq.s32.totalorder %v2727, 1
      %vm2792 = vcmp.eq.s32.totalorder %v2728, 1
      %vm2793 = vcmp.eq.s32.totalorder %v2729, 1
      %vm2794 = vcmp.eq.s32.totalorder %v2730, 1
      %vm2795 = vcmp.eq.s32.totalorder %v2731, 1
      %vm2796 = vcmp.eq.s32.totalorder %v2732, 1
      %vm2797 = vcmp.eq.s32.totalorder %v2733, 1
      %vm2798 = vcmp.eq.s32.totalorder %v2734, 1
      %vm2799 = vcmp.eq.s32.totalorder %v2735, 1
      %vm2800 = vcmp.eq.s32.totalorder %v2736, 1
      %vm2801 = vcmp.eq.s32.totalorder %v2737, 1
      %vm2802 = vcmp.eq.s32.totalorder %v2738, 1
      %vm2803 = vcmp.eq.s32.totalorder %v2739, 1
      %vm2804 = vcmp.eq.s32.totalorder %v2740, 1
      %vm2805 = vcmp.eq.s32.totalorder %v2741, 1
      %vm2806 = vcmp.eq.s32.totalorder %v2742, 1
      %vm2807 = vcmp.eq.s32.totalorder %v2743, 1
      %vm2808 = vcmp.eq.s32.totalorder %v2744, 1
      %vm2809 = vcmp.eq.s32.totalorder %v2745, 1
      %vm2810 = vcmp.eq.s32.totalorder %v2746, 1
      %vm2811 = vcmp.eq.s32.totalorder %v2747, 1
      %vm2812 = vcmp.eq.s32.totalorder %v2748, 1
      %vm2813 = vcmp.eq.s32.totalorder %v2749, 1
      %vm2814 = vcmp.eq.s32.totalorder %v2750, 1
      %vm2815 = vcmp.eq.s32.totalorder %v2751, 1
      %vm2816 = vcmp.eq.s32.totalorder %v2752, 1
      %vm2817 = vcmp.eq.s32.totalorder %v2753, 1
      %vm2818 = vcmp.eq.s32.totalorder %v2754, 1
      %vm2819 = vcmp.eq.s32.totalorder %v2755, 1
      %vm2820 = vcmp.eq.s32.totalorder %v2756, 1
      %vm2821 = vcmp.eq.s32.totalorder %v2757, 1
      %vm2822 = vcmp.eq.s32.totalorder %v2758, 1
      %vm2823 = vcmp.eq.s32.totalorder %v2759, 1
      %vm2824 = vcmp.eq.s32.totalorder %v2760, 1
      %vm2825 = vcmp.eq.s32.totalorder %v2761, 1
      %vm2826 = vcmp.eq.s32.totalorder %v2762, 1
      %vm2827 = vcmp.eq.s32.totalorder %v2763, 1
      %vm2828 = vcmp.eq.s32.totalorder %v2764, 1
      %vm2829 = vmand %vm2765, %vm2637
      %vm2830 = vmand %vm2766, %vm2638
      %vm2831 = vmand %vm2767, %vm2639
      %vm2832 = vmand %vm2768, %vm2640
      %vm2833 = vmand %vm2769, %vm2641
      %vm2834 = vmand %vm2770, %vm2642
      %vm2835 = vmand %vm2771, %vm2643
      %vm2836 = vmand %vm2772, %vm2644
      %vm2837 = vmand %vm2773, %vm2645
      %vm2838 = vmand %vm2774, %vm2646
      %vm2839 = vmand %vm2775, %vm2647
      %vm2840 = vmand %vm2776, %vm2648
      %vm2841 = vmand %vm2777, %vm2649
      %vm2842 = vmand %vm2778, %vm2650
      %vm2843 = vmand %vm2779, %vm2651
      %vm2844 = vmand %vm2780, %vm2652
      %vm2845 = vmand %vm2781, %vm2653
      %vm2846 = vmand %vm2782, %vm2654
      %vm2847 = vmand %vm2783, %vm2655
      %vm2848 = vmand %vm2784, %vm2656
      %vm2849 = vmand %vm2785, %vm2657
      %vm2850 = vmand %vm2786, %vm2658
      %vm2851 = vmand %vm2787, %vm2659
      %vm2852 = vmand %vm2788, %vm2660
      %vm2853 = vmand %vm2789, %vm2661
      %vm2854 = vmand %vm2790, %vm2662
      %vm2855 = vmand %vm2791, %vm2663
      %vm2856 = vmand %vm2792, %vm2664
      %vm2857 = vmand %vm2793, %vm2665
      %vm2858 = vmand %vm2794, %vm2666
      %vm2859 = vmand %vm2795, %vm2667
      %vm2860 = vmand %vm2796, %vm2668
      %vm2861 = vmand %vm2797, %vm2669
      %vm2862 = vmand %vm2798, %vm2670
      %vm2863 = vmand %vm2799, %vm2671
      %vm2864 = vmand %vm2800, %vm2672
      %vm2865 = vmand %vm2801, %vm2673
      %vm2866 = vmand %vm2802, %vm2674
      %vm2867 = vmand %vm2803, %vm2675
      %vm2868 = vmand %vm2804, %vm2676
      %vm2869 = vmand %vm2805, %vm2677
      %vm2870 = vmand %vm2806, %vm2678
      %vm2871 = vmand %vm2807, %vm2679
      %vm2872 = vmand %vm2808, %vm2680
      %vm2873 = vmand %vm2809, %vm2681
      %vm2874 = vmand %vm2810, %vm2682
      %vm2875 = vmand %vm2811, %vm2683
      %vm2876 = vmand %vm2812, %vm2684
      %vm2877 = vmand %vm2813, %vm2685
      %vm2878 = vmand %vm2814, %vm2686
      %vm2879 = vmand %vm2815, %vm2687
      %vm2880 = vmand %vm2816, %vm2688
      %vm2881 = vmand %vm2817, %vm2689
      %vm2882 = vmand %vm2818, %vm2690
      %vm2883 = vmand %vm2819, %vm2691
      %vm2884 = vmand %vm2820, %vm2692
      %vm2885 = vmand %vm2821, %vm2693
      %vm2886 = vmand %vm2822, %vm2694
      %vm2887 = vmand %vm2823, %vm2695
      %vm2888 = vmand %vm2824, %vm2696
      %vm2889 = vmand %vm2825, %vm2697
      %vm2890 = vmand %vm2826, %vm2698
      %vm2891 = vmand %vm2827, %vm2699
      %vm2892 = vmand %vm2828, %vm2700
      %v2893 = vsel %vm2829, %v2316, 0.0
      %v2894 = vsel %vm2830, %v2317, 0.0
      %v2895 = vsel %vm2831, %v2318, 0.0
      %v2896 = vsel %vm2832, %v2319, 0.0
      %v2897 = vsel %vm2833, %v2320, 0.0
      %v2898 = vsel %vm2834, %v2321, 0.0
      %v2899 = vsel %vm2835, %v2322, 0.0
      %v2900 = vsel %vm2836, %v2323, 0.0
      %v2901 = vsel %vm2837, %v2324, 0.0
      %v2902 = vsel %vm2838, %v2325, 0.0
      %v2903 = vsel %vm2839, %v2326, 0.0
      %v2904 = vsel %vm2840, %v2327, 0.0
      %v2905 = vsel %vm2841, %v2328, 0.0
      %v2906 = vsel %vm2842, %v2329, 0.0
      %v2907 = vsel %vm2843, %v2330, 0.0
      %v2908 = vsel %vm2844, %v2331, 0.0
      %v2909 = vsel %vm2845, %v2332, 0.0
      %v2910 = vsel %vm2846, %v2333, 0.0
      %v2911 = vsel %vm2847, %v2334, 0.0
      %v2912 = vsel %vm2848, %v2335, 0.0
      %v2913 = vsel %vm2849, %v2336, 0.0
      %v2914 = vsel %vm2850, %v2337, 0.0
      %v2915 = vsel %vm2851, %v2338, 0.0
      %v2916 = vsel %vm2852, %v2339, 0.0
      %v2917 = vsel %vm2853, %v2340, 0.0
      %v2918 = vsel %vm2854, %v2341, 0.0
      %v2919 = vsel %vm2855, %v2342, 0.0
      %v2920 = vsel %vm2856, %v2343, 0.0
      %v2921 = vsel %vm2857, %v2344, 0.0
      %v2922 = vsel %vm2858, %v2345, 0.0
      %v2923 = vsel %vm2859, %v2346, 0.0
      %v2924 = vsel %vm2860, %v2347, 0.0
      %v2925 = vsel %vm2861, %v2348, 0.0
      %v2926 = vsel %vm2862, %v2349, 0.0
      %v2927 = vsel %vm2863, %v2350, 0.0
      %v2928 = vsel %vm2864, %v2351, 0.0
      %v2929 = vsel %vm2865, %v2352, 0.0
      %v2930 = vsel %vm2866, %v2353, 0.0
      %v2931 = vsel %vm2867, %v2354, 0.0
      %v2932 = vsel %vm2868, %v2355, 0.0
      %v2933 = vsel %vm2869, %v2356, 0.0
      %v2934 = vsel %vm2870, %v2357, 0.0
      %v2935 = vsel %vm2871, %v2358, 0.0
      %v2936 = vsel %vm2872, %v2359, 0.0
      %v2937 = vsel %vm2873, %v2360, 0.0
      %v2938 = vsel %vm2874, %v2361, 0.0
      %v2939 = vsel %vm2875, %v2362, 0.0
      %v2940 = vsel %vm2876, %v2363, 0.0
      %v2941 = vsel %vm2877, %v2364, 0.0
      %v2942 = vsel %vm2878, %v2365, 0.0
      %v2943 = vsel %vm2879, %v2366, 0.0
      %v2944 = vsel %vm2880, %v2367, 0.0
      %v2945 = vsel %vm2881, %v2368, 0.0
      %v2946 = vsel %vm2882, %v2369, 0.0
      %v2947 = vsel %vm2883, %v2370, 0.0
      %v2948 = vsel %vm2884, %v2371, 0.0
      %v2949 = vsel %vm2885, %v2372, 0.0
      %v2950 = vsel %vm2886, %v2373, 0.0
      %v2951 = vsel %vm2887, %v2374, 0.0
      %v2952 = vsel %vm2888, %v2375, 0.0
      %v2953 = vsel %vm2889, %v2376, 0.0
      %v2954 = vsel %vm2890, %v2377, 0.0
      %v2955 = vsel %vm2891, %v2378, 0.0
      %v2956 = vsel %vm2892, %v2379, 0.0
      %v2957 = vld [vmem:[%s325] sm:$0x1]
      %v2958 = vadd.f32 %v2893, %v2894
      %v2959 = vadd.f32 %v2958, %v2895
      %v2960 = vadd.f32 %v2959, %v2896
      %v2961 = vadd.f32 %v2960, %v2897
      %v2962 = vadd.f32 %v2961, %v2898
      %v2963 = vadd.f32 %v2962, %v2899
      %v2964 = vadd.f32 %v2963, %v2900
      %v2965 = vadd.f32 %v2964, %v2901
      %v2966 = vadd.f32 %v2965, %v2902
      %v2967 = vadd.f32 %v2966, %v2903
      %v2968 = vadd.f32 %v2967, %v2904
      %v2969 = vadd.f32 %v2968, %v2905
      %v2970 = vadd.f32 %v2969, %v2906
      %v2971 = vadd.f32 %v2970, %v2907
      %v2972 = vadd.f32 %v2971, %v2908
      %v2973 = vadd.f32 %v2972, %v2909
      %v2974 = vadd.f32 %v2973, %v2910
      %v2975 = vadd.f32 %v2974, %v2911
      %v2976 = vadd.f32 %v2975, %v2912
      %v2977 = vadd.f32 %v2976, %v2913
      %v2978 = vadd.f32 %v2977, %v2914
      %v2979 = vadd.f32 %v2978, %v2915
      %v2980 = vadd.f32 %v2979, %v2916
      %v2981 = vadd.f32 %v2980, %v2917
      %v2982 = vadd.f32 %v2981, %v2918
      %v2983 = vadd.f32 %v2982, %v2919
      %v2984 = vadd.f32 %v2983, %v2920
      %v2985 = vadd.f32 %v2984, %v2921
      %v2986 = vadd.f32 %v2985, %v2922
      %v2987 = vadd.f32 %v2986, %v2923
      %v2988 = vadd.f32 %v2987, %v2924
      %v2989 = vadd.f32 %v2988, %v2925
      %v2990 = vadd.f32 %v2989, %v2926
      %v2991 = vadd.f32 %v2990, %v2927
      %v2992 = vadd.f32 %v2991, %v2928
      %v2993 = vadd.f32 %v2992, %v2929
      %v2994 = vadd.f32 %v2993, %v2930
      %v2995 = vadd.f32 %v2994, %v2931
      %v2996 = vadd.f32 %v2995, %v2932
      %v2997 = vadd.f32 %v2996, %v2933
      %v2998 = vadd.f32 %v2997, %v2934
      %v2999 = vadd.f32 %v2998, %v2935
      %v3000 = vadd.f32 %v2999, %v2936
      %v3001 = vadd.f32 %v3000, %v2937
      %v3002 = vadd.f32 %v3001, %v2938
      %v3003 = vadd.f32 %v3002, %v2939
      %v3004 = vadd.f32 %v3003, %v2940
      %v3005 = vadd.f32 %v3004, %v2941
      %v3006 = vadd.f32 %v3005, %v2942
      %v3007 = vadd.f32 %v3006, %v2943
      %v3008 = vadd.f32 %v3007, %v2944
      %v3009 = vadd.f32 %v3008, %v2945
      %v3010 = vadd.f32 %v3009, %v2946
      %v3011 = vadd.f32 %v3010, %v2947
      %v3012 = vadd.f32 %v3011, %v2948
      %v3013 = vadd.f32 %v3012, %v2949
      %v3014 = vadd.f32 %v3013, %v2950
      %v3015 = vadd.f32 %v3014, %v2951
      %v3016 = vadd.f32 %v3015, %v2952
      %v3017 = vadd.f32 %v3016, %v2953
      %v3018 = vadd.f32 %v3017, %v2954
      %v3019 = vadd.f32 %v3018, %v2955
      %v3020 = vadd.f32 %v3019, %v2956
      %v3021 = vrot.slane %v3020, 4
      %v3022 = vadd.f32 %v3020, %v3021
      %v3023 = vrot.slane %v3022, 2
      %v3024 = vadd.f32 %v3022, %v3023
      %v3025 = vrot.slane %v3024, 1
      %v3026 = vadd.f32 %v3024, %v3025
      %v3027 = vadd.f32 %v2957, %v3026
      %3028 = vst [vmem:[%s325] sm:$0x1] %v3027
      %p3029 = scmp.lt.s32.totalorder %s19, 0
      %s3030 = scalar_select %p3029, %s19, 0
      %s3031 = scalar_lea.vmem %s4, %s3030
      // Predicated region
      $region41: #{data_eval_sup_cls.1} parent=35 // pred_check
        %p3032 = pneg %p155
      $region42: #{data_eval_sup_cls.1} parent=35 // pred_check_branch
        %3034 = sbr.rel (%p3032) target = $region44
      $region43: #{data_eval_sup_cls.1} parent=35 // pred_region
        _
      $region44: #{data_eval_sup_cls.1} parent=35 // pred_fallthru
        _
      // Predicated region
      $region45: #{data_eval_sup_cls.1} parent=35 // pred_check
        %p3035 = pneg %p155
      $region46: #{data_eval_sup_cls.1} parent=35 // pred_check_branch
        %3037 = sbr.rel (%p3035) target = $region48
      $region47: #{data_eval_sup_cls.1} parent=35 // pred_region
        %p3038 = scmp.lt.s32.totalorder %s19, 0
        %s3039 = scalar_select %p3038, %s19, 0
        %s3040 = scalar_lea.vmem %s4, %s3039
      $region48: #{data_eval_sup_cls.1} parent=35 // pred_fallthru
        _
    $region36: #{data_eval_sup_cls.1} parent=5 // pred_fallthru
      _
    %p3041 = scmp.le.s32.totalorder 2, %s10
    // Predicated region
    $region49: #{data_eval_sup_cls.1} parent=5 // pred_check
      %p3042 = pneg %p3041
    $region50: #{data_eval_sup_cls.1} parent=5 // pred_check_branch
      %3044 = sbr.rel (%p3042) target = $region52
    $region51: #{data_eval_sup_cls.1} parent=5 // pred_region
      %s3045 = ssub.s32 %s10, 2
    $region52: #{data_eval_sup_cls.1} parent=5 // pred_fallthru
      _
  $region6: #{data_eval_sup_cls.1} parent=0 // loop_footer
    %s14 = sadd.s32 1, %s10
  $region7: #{data_eval_sup_cls.1} parent=0 // loop_footer_branch
    %9 = sbr.rel target = $region3
  $region8: #{data_eval_sup_cls.1} parent=0 // loop_exit
    _

</llo_original>
